<compile_context>
chip_gen: v5e
topology: v5e:2x2
jax: 0.10.0
libtpu: 0.0.40
codegen_flags: <defaults>
</compile_context>

<pallas_src>
import functools
import math

import jax
import jax.numpy as jnp
from jax import lax
from jax.experimental import pallas as pl
from jax.experimental.pallas import tpu as pltpu


def _pick_time_tile(T: int, hop: int, max_tile: int = 1024) -> int:
    """Largest tile <= max_tile that divides T and is a multiple of both 128 and hop."""
    base = (128 * hop) // math.gcd(128, hop)
    if T % base != 0:
        return T  # fallback: single tile (block == full dim, still valid)
    m = T // base
    best = 1
    for d in range(1, m + 1):
        if m % d == 0 and d * base <= max_tile:
            best = d
    return best * base


def _enhance_harmonic_kernel(nd_ref, amp_ref, coef_ref, f0_ref, u_ref, out_ref,
                             carry_ref, *, sample_rate: int, hop_length: int,
                             time_tile: int, frame_window: int):
    """One (batch, time_tile) grid step.

    Block shapes seen by the kernel:
      nd_ref/coef_ref : (1, F, H)     amp_ref/f0_ref : (1, F, 1)
      u_ref           : (TT, TT)      out_ref        : (1, 1, TT)
      carry_ref       : SMEM (1,) f32 running phase (wrapped mod 2*pi)
    """
    F, H = nd_ref.shape[1], nd_ref.shape[2]
    TT = time_tile
    FW = frame_window
    fpt = TT // hop_length  # frames fully covered per tile (tiles are hop-aligned)

    t_tile = pl.program_id(1)

    @pl.when(t_tile == 0)
    def _init():
        carry_ref[0] = jnp.float32(0.0)

    # ---- frame window touched by this time tile ----
    start = jnp.clip(t_tile * fpt - 1, 0, F - FW)            # int32 scalar

    nd_w = nd_ref[0, pl.ds(start, FW), :]                    # (FW, H)
    coef_w = coef_ref[0, pl.ds(start, FW), :]                # (FW, H)
    amp_w = amp_ref[0, pl.ds(start, FW), :]                  # (FW, 1)
    f0_w = f0_ref[0, pl.ds(start, FW), :]                    # (FW, 1)

    # ---- remove_above_nyquist (at frame rate, before upsampling) ----
    nd_w = jnp.where(f0_w * coef_w >= sample_rate / 2.0, 0.0, nd_w)

    # small transposes so harmonics sit on sublanes / window-frames on lanes
    nd_t = nd_w.T                                            # (H, FW)
    amp_t = amp_w.T                                          # (1, FW)
    f0_t = f0_w.T                                            # (1, FW)

    # ---- linear-upsampling coordinates, time on the lane axis ----
    # Matches torch.nn.functional.interpolate(mode='linear', align_corners=False).
    t_loc = lax.broadcasted_iota(jnp.int32, (1, TT), 1)
    t_glb = t_tile * TT + t_loc
    src = jnp.maximum((t_glb.astype(jnp.float32) + 0.5) / float(hop_length) - 0.5, 0.0)
    i0f = jnp.floor(src)
    lam = src - i0f                                          # (1, TT)
    i0 = i0f.astype(jnp.int32)
    i1 = jnp.minimum(i0 + 1, F - 1)
    i0r = i0 - start                                         # window-relative, int32
    i1r = i1 - start
    w0 = 1.0 - lam

    # ---- direct lerp (masked sum over the few frames this tile touches) ----
    nd_up = jnp.zeros((H, TT), jnp.float32)
    amp_up = jnp.zeros((1, TT), jnp.float32)
    f_up = jnp.zeros((1, TT), jnp.float32)
    for f in range(FW):                                      # FW is small & static
        wf = jnp.where(i0r == f, w0, 0.0) + jnp.where(i1r == f, lam, 0.0)  # (1, TT)
        nd_up = nd_up + nd_t[:, f:f + 1] * wf                # (H,1)*(1,TT) -> (H,TT)
        amp_up = amp_up + amp_t[:, f:f + 1] * wf
        f_up = f_up + f0_t[:, f:f + 1] * wf

    # ---- cumulative phase: blocked cumsum (tile-local matmul) + wrapped carry ----
    two_pi = 2.0 * math.pi
    inv_two_pi = 1.0 / two_pi
    dphi = (two_pi / float(sample_rate)) * f_up              # (1, TT)
    # inclusive prefix sum within the tile: (1,TT) @ (TT,TT) upper-triangular ones
    omega_local = jnp.dot(dphi, u_ref[...], preferred_element_type=jnp.float32)

    carry = carry_ref[0]
    omega = omega_local + carry
    total = carry + jnp.sum(dphi)
    carry_ref[0] = total - two_pi * jnp.floor(total * inv_two_pi)   # keep carry bounded
    # wrap mod 2*pi (exact under integer harmonic multiplication; keeps args small)
    omega = omega - two_pi * jnp.floor(omega * inv_two_pi)

    # ---- harmonic bank via sin/cos angle-addition recurrence ----
    s1 = jnp.sin(omega)                                      # only transcendentals
    c1 = jnp.cos(omega)
    two_c1 = 2.0 * c1
    acc = nd_up[0:1, :] * s1                                 # k = 1
    s_km2 = jnp.zeros_like(s1)                               # sin(0*w) = 0
    s_km1 = s1
    for k in range(2, H + 1):                                # static unroll over harmonics
        s_k = two_c1 * s_km1 - s_km2
        acc = acc + nd_up[k - 1:k, :] * s_k
        s_km2 = s_km1
        s_km1 = s_k

    out_ref[0] = acc * amp_up                                # (1, TT) lane-dense store


def enhance_harmonic_oscillator(harmonic_head_output, f0, *, sample_rate=16000,
                                hop_length=256, is_smooth=False, time_tile=None):
    """JAX/Pallas equivalent of EnhanceHarmonicOscillator.forward (is_smooth=False path)."""
    if is_smooth:
        # TODO(synk): smooth_envelop (hamming-window unfold/fold of global_amp) not implemented.
        raise NotImplementedError("is_smooth=True path not implemented")

    n_harm_dis, global_amp, coef = harmonic_head_output
    n_harm_dis = jnp.asarray(n_harm_dis, jnp.float32)
    global_amp = jnp.asarray(global_amp, jnp.float32)
    coef = jnp.asarray(coef, jnp.float32)
    f0 = jnp.asarray(f0, jnp.float32)

    B, F, H = n_harm_dis.shape
    T = F * hop_length

    TT = _pick_time_tile(T, hop_length) if time_tile is None else int(time_tile)
    if TT <= 0 or T % TT != 0:
        raise ValueError(f"time_tile={TT} must divide T={T}")
    if TT != T and (TT % hop_length != 0 or TT % 128 != 0):
        raise ValueError(f"time_tile={TT} must be a multiple of hop ({hop_length}) and 128")
    NT = T // TT
    FW = min(F, TT // hop_length + 2)   # frames a single tile can touch

    # Tile-local inclusive-cumsum operator, hoisted out of the kernel (loaded once).
    cum_tri = jnp.triu(jnp.ones((TT, TT), jnp.float32))

    kernel = functools.partial(_enhance_harmonic_kernel, sample_rate=sample_rate,
                               hop_length=hop_length, time_tile=TT, frame_window=FW)

    out = pl.pallas_call(
        kernel,
        out_shape=jax.ShapeDtypeStruct((B * NT, 1, TT), jnp.float32),
        grid_spec=pltpu.PrefetchScalarGridSpec(
            num_scalar_prefetch=0,
            grid=(B, NT),
            in_specs=[
                pl.BlockSpec((1, F, H), lambda b, t: (b, 0, 0)),   # n_harm_dis
                pl.BlockSpec((1, F, 1), lambda b, t: (b, 0, 0)),   # global_amp
                pl.BlockSpec((1, F, H), lambda b, t: (b, 0, 0)),   # enhance_harmonic_coef
                pl.BlockSpec((1, F, 1), lambda b, t: (b, 0, 0)),   # f0
                pl.BlockSpec((TT, TT), lambda b, t: (0, 0)),       # cumsum operator (resident)
            ],
            out_specs=pl.BlockSpec((1, 1, TT), lambda b, t: (b * NT + t, 0, 0)),
            scratch_shapes=[pltpu.SMEM((1,), jnp.float32)],        # carried phase
        ),
        compiler_params=pltpu.CompilerParams(
            dimension_semantics=("parallel", "arbitrary"),
            vmem_limit_bytes=32 * 1024 * 1024,
        ),
    )(n_harm_dis, global_amp, coef, f0, cum_tri)

    return out.reshape(B, T, 1)


# ---------------- pure-JAX reference (sanity check only) ----------------
def _upsample_linear_ref(x, factor):
    B, F, C = x.shape
    T = F * factor
    t = jnp.arange(T, dtype=jnp.float32)
    src = jnp.maximum((t + 0.5) / factor - 0.5, 0.0)
    i0 = jnp.floor(src).astype(jnp.int32)
    lam = src - i0.astype(jnp.float32)
    i1 = jnp.minimum(i0 + 1, F - 1)
    return (x[:, i0, :] * (1.0 - lam)[None, :, None]
            + x[:, i1, :] * lam[None, :, None])


def _reference(nd, amp, coef, f0, sample_rate, hop_length):
    nd = jnp.where(f0 * coef >= sample_rate / 2.0, 0.0, nd)
    nd_up = _upsample_linear_ref(nd, hop_length)
    amp_up = _upsample_linear_ref(amp, hop_length)
    harm_amp = nd_up * amp_up
    f_up = _upsample_linear_ref(f0, hop_length)
    omega = jnp.cumsum(2.0 * math.pi * f_up / sample_rate, axis=1)
    k = jnp.arange(1, nd.shape[-1] + 1, dtype=jnp.float32)
    return jnp.sum(jnp.sin(omega * k) * harm_amp, axis=-1, keepdims=True)


if __name__ == "__main__":
    key = jax.random.PRNGKey(0)
    k1, k2, k3, k4 = jax.random.split(key, 4)

    # Small shapes consistent with the module: B=2 batches, 8 frames, 32 harmonics,
    # hop_length=64 -> T = 512 output samples. sample_rate=16000.
    B, F, H = 2, 8, 32
    sample_rate, hop_length = 16000, 64

    n_harm_dis = jax.random.uniform(k1, (B, F, H), jnp.float32)
    global_amp = jax.random.uniform(k2, (B, F, 1), jnp.float32)
    # coefficients ~ harmonic index, so high harmonics cross Nyquist for high f0
    coef = (jnp.arange(1, H + 1, dtype=jnp.float32)[None, None, :]
            * (1.0 + 0.01 * jax.random.uniform(k3, (B, F, H), jnp.float32)))
    f0 = 100.0 + 300.0 * jax.random.uniform(k4, (B, F, 1), jnp.float32)

    # Explicit small time tile (256) => 2 time tiles, exercising the carried-phase path.
    out = enhance_harmonic_oscillator((n_harm_dis, global_amp, coef), f0,
                                      sample_rate=sample_rate, hop_length=hop_length,
                                      time_tile=256)
    out = jax.block_until_ready(out)

    assert out.shape == (B, F * hop_length, 1)
    assert bool(jnp.all(jnp.isfinite(out)))

    # Loose sanity check vs. pure-JAX reference (the reference keeps an unwrapped f32
    # cumulative phase whose error is amplified by high harmonic numbers, hence the
    # generous tolerance; the kernel wraps the phase mod 2*pi and is the more accurate one).
    ref = _reference(n_harm_dis, global_amp, coef, f0, sample_rate, hop_length)
    max_diff = float(jnp.max(jnp.abs(out - ref)))
    assert max_diff < 0.25, max_diff

    # Consistency between tile configurations (single tile vs. two tiles with carry).
    out_auto = enhance_harmonic_oscillator((n_harm_dis, global_amp, coef), f0,
                                           sample_rate=sample_rate, hop_length=hop_length)
    out_auto = jax.block_until_ready(out_auto)
    tile_diff = float(jnp.max(jnp.abs(out - out_auto)))
    assert tile_diff < 2e-2, tile_diff

    print("KERNEL_OK")
</pallas_src>

<mosaic_0001>
module attributes {stable_mosaic.version = 11 : i64} {
  func.func @_enhance_harmonic_kernel(%arg0: i32, %arg1: i32, %arg2: memref<1x8x32xf32, #tpu.memory_space<vmem>>, %arg3: memref<1x8x1xf32, #tpu.memory_space<vmem>>, %arg4: memref<1x8x32xf32, #tpu.memory_space<vmem>>, %arg5: memref<1x8x1xf32, #tpu.memory_space<vmem>>, %arg6: memref<256x256xf32, #tpu.memory_space<vmem>>, %arg7: memref<1x1x256xf32, #tpu.memory_space<vmem>>, %arg8: memref<1xf32, #tpu.memory_space<smem>>) attributes {dimension_semantics = [#tpu.dimension_semantics<parallel>, #tpu.dimension_semantics<arbitrary>], iteration_bounds = array<i64: 2, 2>, scalar_prefetch = 0 : i64, scratch_operands = 1 : i64, tpu.core_type = #tpu.core_type<tc>, window_params = [{transform_indices = @transform_0, window_bounds = array<i64: 1, 8, 32>}, {transform_indices = @transform_1, window_bounds = array<i64: 1, 8, 1>}, {transform_indices = @transform_2, window_bounds = array<i64: 1, 8, 32>}, {transform_indices = @transform_3, window_bounds = array<i64: 1, 8, 1>}, {pipeline_mode = #tpu.pipeline_mode<synchronous>, transform_indices = @transform_4, window_bounds = array<i64: 256, 256>}, {transform_indices = @transform_5, window_bounds = array<i64: 1, 1, 256>}]} {
    %c0_i32 = arith.constant 0 : i32
    %0 = arith.cmpi eq, %arg1, %c0_i32 : i32
    %1 = arith.extui %0 : i1 to i32
    %c0_i32_0 = arith.constant 0 : i32
    %2 = arith.cmpi ne, %1, %c0_i32_0 : i32
    scf.if %2 {
      %cst_57 = arith.constant 0.000000e+00 : f32
      %c0_58 = arith.constant 0 : index
      %378 = memref.load %arg8[%c0_58] : memref<1xf32, #tpu.memory_space<smem>>
      memref.store %cst_57, %arg8[%c0_58] : memref<1xf32, #tpu.memory_space<smem>>
    } else {
    }
    %c4_i32 = arith.constant 4 : i32
    %3 = arith.muli %arg1, %c4_i32 : i32
    %c1_i32 = arith.constant 1 : i32
    %4 = arith.subi %3, %c1_i32 : i32
    %c0_i32_1 = arith.constant 0 : i32
    %c2_i32 = arith.constant 2 : i32
    %5 = arith.maxsi %c0_i32_1, %4 : i32
    %6 = arith.minsi %c2_i32, %5 : i32
    %c0 = arith.constant 0 : index
    %7 = arith.index_cast %6 : i32 to index
    %c0_2 = arith.constant 0 : index
    %8 = vector.load %arg2[%c0, %7, %c0_2] : memref<1x8x32xf32, #tpu.memory_space<vmem>>, vector<1x6x32xf32>
    %9 = vector.shape_cast %8 : vector<1x6x32xf32> to vector<6x32xf32>
    %c0_3 = arith.constant 0 : index
    %10 = arith.index_cast %6 : i32 to index
    %c0_4 = arith.constant 0 : index
    %11 = vector.load %arg4[%c0_3, %10, %c0_4] : memref<1x8x32xf32, #tpu.memory_space<vmem>>, vector<1x6x32xf32>
    %12 = vector.shape_cast %11 : vector<1x6x32xf32> to vector<6x32xf32>
    %c0_5 = arith.constant 0 : index
    %13 = arith.index_cast %6 : i32 to index
    %c0_6 = arith.constant 0 : index
    %14 = vector.load %arg3[%c0_5, %13, %c0_6] : memref<1x8x1xf32, #tpu.memory_space<vmem>>, vector<1x6x1xf32>
    %15 = vector.shape_cast %14 : vector<1x6x1xf32> to vector<6x1xf32>
    %c0_7 = arith.constant 0 : index
    %16 = arith.index_cast %6 : i32 to index
    %c0_8 = arith.constant 0 : index
    %17 = vector.load %arg5[%c0_7, %16, %c0_8] : memref<1x8x1xf32, #tpu.memory_space<vmem>>, vector<1x6x1xf32>
    %18 = vector.shape_cast %17 : vector<1x6x1xf32> to vector<6x1xf32>
    %19 = vector.broadcast %18 : vector<6x1xf32> to vector<6x32xf32>
    %20 = arith.mulf %19, %12 : vector<6x32xf32>
    %cst = arith.constant 8.000000e+03 : f32
    %21 = vector.broadcast %cst : f32 to vector<6x32xf32>
    %22 = arith.cmpf oge, %20, %21 : vector<6x32xf32>
    %cst_9 = arith.constant 0.000000e+00 : f32
    %23 = vector.broadcast %cst_9 : f32 to vector<6x32xf32>
    %24 = arith.select %22, %23, %9 : vector<6x32xi1>, vector<6x32xf32>
    %25 = tpu.transpose %24, [1, 0] : vector<6x32xf32> -> vector<32x6xf32>
    %26 = tpu.transpose %15, [1, 0] : vector<6x1xf32> -> vector<1x6xf32>
    %27 = tpu.transpose %18, [1, 0] : vector<6x1xf32> -> vector<1x6xf32>
    %28 = tpu.iota {dimensions = array<i32: 1>} : vector<1x256xi32>
    %c256_i32 = arith.constant 256 : i32
    %29 = arith.muli %arg1, %c256_i32 : i32
    %30 = vector.broadcast %29 : i32 to vector<1x256xi32>
    %31 = arith.addi %30, %28 : vector<1x256xi32>
    %32 = arith.sitofp %31 : vector<1x256xi32> to vector<1x256xf32>
    %cst_10 = arith.constant 5.000000e-01 : f32
    %33 = vector.broadcast %cst_10 : f32 to vector<1x256xf32>
    %34 = arith.addf %32, %33 : vector<1x256xf32>
    %cst_11 = arith.constant 6.400000e+01 : f32
    %35 = vector.broadcast %cst_11 : f32 to vector<1x256xf32>
    %36 = arith.divf %34, %35 : vector<1x256xf32>
    %cst_12 = arith.constant 5.000000e-01 : f32
    %37 = vector.broadcast %cst_12 : f32 to vector<1x256xf32>
    %38 = arith.subf %36, %37 : vector<1x256xf32>
    %cst_13 = arith.constant 0.000000e+00 : f32
    %39 = vector.broadcast %cst_13 : f32 to vector<1x256xf32>
    %40 = arith.maximumf %38, %39 : vector<1x256xf32>
    %41 = math.floor %40 : vector<1x256xf32>
    %42 = arith.subf %40, %41 : vector<1x256xf32>
    %43 = arith.fptosi %41 : vector<1x256xf32> to vector<1x256xi32>
    %c1_i32_14 = arith.constant 1 : i32
    %44 = vector.broadcast %c1_i32_14 : i32 to vector<1x256xi32>
    %45 = arith.addi %43, %44 : vector<1x256xi32>
    %c7_i32 = arith.constant 7 : i32
    %46 = vector.broadcast %c7_i32 : i32 to vector<1x256xi32>
    %47 = arith.minsi %45, %46 : vector<1x256xi32>
    %48 = vector.broadcast %6 : i32 to vector<1x256xi32>
    %49 = arith.subi %43, %48 : vector<1x256xi32>
    %50 = vector.broadcast %6 : i32 to vector<1x256xi32>
    %51 = arith.subi %47, %50 : vector<1x256xi32>
    %cst_15 = arith.constant 1.000000e+00 : f32
    %52 = vector.broadcast %cst_15 : f32 to vector<1x256xf32>
    %53 = arith.subf %52, %42 : vector<1x256xf32>
    %cst_16 = arith.constant 0.000000e+00 : f32
    %54 = vector.broadcast %cst_16 : f32 to vector<32x256xf32>
    %cst_17 = arith.constant 0.000000e+00 : f32
    %55 = vector.broadcast %cst_17 : f32 to vector<1x256xf32>
    %cst_18 = arith.constant 0.000000e+00 : f32
    %56 = vector.broadcast %cst_18 : f32 to vector<1x256xf32>
    %c0_i32_19 = arith.constant 0 : i32
    %57 = vector.broadcast %c0_i32_19 : i32 to vector<1x256xi32>
    %58 = arith.cmpi eq, %49, %57 : vector<1x256xi32>
    %cst_20 = arith.constant 0.000000e+00 : f32
    %59 = vector.broadcast %cst_20 : f32 to vector<1x256xf32>
    %60 = arith.select %58, %53, %59 : vector<1x256xi1>, vector<1x256xf32>
    %c0_i32_21 = arith.constant 0 : i32
    %61 = vector.broadcast %c0_i32_21 : i32 to vector<1x256xi32>
    %62 = arith.cmpi eq, %51, %61 : vector<1x256xi32>
    %cst_22 = arith.constant 0.000000e+00 : f32
    %63 = vector.broadcast %cst_22 : f32 to vector<1x256xf32>
    %64 = arith.select %62, %42, %63 : vector<1x256xi1>, vector<1x256xf32>
    %65 = arith.addf %60, %64 : vector<1x256xf32>
    %66 = vector.extract_strided_slice %25 {offsets = [0, 0], sizes = [32, 1], strides = [1, 1]} : vector<32x6xf32> to vector<32x1xf32>
    %67 = vector.broadcast %66 : vector<32x1xf32> to vector<32x256xf32>
    %68 = vector.broadcast %65 : vector<1x256xf32> to vector<32x256xf32>
    %69 = arith.mulf %67, %68 : vector<32x256xf32>
    %70 = arith.addf %54, %69 : vector<32x256xf32>
    %71 = vector.extract_strided_slice %26 {offsets = [0, 0], sizes = [1, 1], strides = [1, 1]} : vector<1x6xf32> to vector<1x1xf32>
    %72 = vector.broadcast %71 : vector<1x1xf32> to vector<1x256xf32>
    %73 = arith.mulf %72, %65 : vector<1x256xf32>
    %74 = arith.addf %55, %73 : vector<1x256xf32>
    %75 = vector.extract_strided_slice %27 {offsets = [0, 0], sizes = [1, 1], strides = [1, 1]} : vector<1x6xf32> to vector<1x1xf32>
    %76 = vector.broadcast %75 : vector<1x1xf32> to vector<1x256xf32>
    %77 = arith.mulf %76, %65 : vector<1x256xf32>
    %78 = arith.addf %56, %77 : vector<1x256xf32>
    %c1_i32_23 = arith.constant 1 : i32
    %79 = vector.broadcast %c1_i32_23 : i32 to vector<1x256xi32>
    %80 = arith.cmpi eq, %49, %79 : vector<1x256xi32>
    %cst_24 = arith.constant 0.000000e+00 : f32
    %81 = vector.broadcast %cst_24 : f32 to vector<1x256xf32>
    %82 = arith.select %80, %53, %81 : vector<1x256xi1>, vector<1x256xf32>
    %c1_i32_25 = arith.constant 1 : i32
    %83 = vector.broadcast %c1_i32_25 : i32 to vector<1x256xi32>
    %84 = arith.cmpi eq, %51, %83 : vector<1x256xi32>
    %cst_26 = arith.constant 0.000000e+00 : f32
    %85 = vector.broadcast %cst_26 : f32 to vector<1x256xf32>
    %86 = arith.select %84, %42, %85 : vector<1x256xi1>, vector<1x256xf32>
    %87 = arith.addf %82, %86 : vector<1x256xf32>
    %88 = vector.extract_strided_slice %25 {offsets = [0, 1], sizes = [32, 1], strides = [1, 1]} : vector<32x6xf32> to vector<32x1xf32>
    %89 = vector.broadcast %88 : vector<32x1xf32> to vector<32x256xf32>
    %90 = vector.broadcast %87 : vector<1x256xf32> to vector<32x256xf32>
    %91 = arith.mulf %89, %90 : vector<32x256xf32>
    %92 = arith.addf %70, %91 : vector<32x256xf32>
    %93 = vector.extract_strided_slice %26 {offsets = [0, 1], sizes = [1, 1], strides = [1, 1]} : vector<1x6xf32> to vector<1x1xf32>
    %94 = vector.broadcast %93 : vector<1x1xf32> to vector<1x256xf32>
    %95 = arith.mulf %94, %87 : vector<1x256xf32>
    %96 = arith.addf %74, %95 : vector<1x256xf32>
    %97 = vector.extract_strided_slice %27 {offsets = [0, 1], sizes = [1, 1], strides = [1, 1]} : vector<1x6xf32> to vector<1x1xf32>
    %98 = vector.broadcast %97 : vector<1x1xf32> to vector<1x256xf32>
    %99 = arith.mulf %98, %87 : vector<1x256xf32>
    %100 = arith.addf %78, %99 : vector<1x256xf32>
    %c2_i32_27 = arith.constant 2 : i32
    %101 = vector.broadcast %c2_i32_27 : i32 to vector<1x256xi32>
    %102 = arith.cmpi eq, %49, %101 : vector<1x256xi32>
    %cst_28 = arith.constant 0.000000e+00 : f32
    %103 = vector.broadcast %cst_28 : f32 to vector<1x256xf32>
    %104 = arith.select %102, %53, %103 : vector<1x256xi1>, vector<1x256xf32>
    %c2_i32_29 = arith.constant 2 : i32
    %105 = vector.broadcast %c2_i32_29 : i32 to vector<1x256xi32>
    %106 = arith.cmpi eq, %51, %105 : vector<1x256xi32>
    %cst_30 = arith.constant 0.000000e+00 : f32
    %107 = vector.broadcast %cst_30 : f32 to vector<1x256xf32>
    %108 = arith.select %106, %42, %107 : vector<1x256xi1>, vector<1x256xf32>
    %109 = arith.addf %104, %108 : vector<1x256xf32>
    %110 = vector.extract_strided_slice %25 {offsets = [0, 2], sizes = [32, 1], strides = [1, 1]} : vector<32x6xf32> to vector<32x1xf32>
    %111 = vector.broadcast %110 : vector<32x1xf32> to vector<32x256xf32>
    %112 = vector.broadcast %109 : vector<1x256xf32> to vector<32x256xf32>
    %113 = arith.mulf %111, %112 : vector<32x256xf32>
    %114 = arith.addf %92, %113 : vector<32x256xf32>
    %115 = vector.extract_strided_slice %26 {offsets = [0, 2], sizes = [1, 1], strides = [1, 1]} : vector<1x6xf32> to vector<1x1xf32>
    %116 = vector.broadcast %115 : vector<1x1xf32> to vector<1x256xf32>
    %117 = arith.mulf %116, %109 : vector<1x256xf32>
    %118 = arith.addf %96, %117 : vector<1x256xf32>
    %119 = vector.extract_strided_slice %27 {offsets = [0, 2], sizes = [1, 1], strides = [1, 1]} : vector<1x6xf32> to vector<1x1xf32>
    %120 = vector.broadcast %119 : vector<1x1xf32> to vector<1x256xf32>
    %121 = arith.mulf %120, %109 : vector<1x256xf32>
    %122 = arith.addf %100, %121 : vector<1x256xf32>
    %c3_i32 = arith.constant 3 : i32
    %123 = vector.broadcast %c3_i32 : i32 to vector<1x256xi32>
    %124 = arith.cmpi eq, %49, %123 : vector<1x256xi32>
    %cst_31 = arith.constant 0.000000e+00 : f32
    %125 = vector.broadcast %cst_31 : f32 to vector<1x256xf32>
    %126 = arith.select %124, %53, %125 : vector<1x256xi1>, vector<1x256xf32>
    %c3_i32_32 = arith.constant 3 : i32
    %127 = vector.broadcast %c3_i32_32 : i32 to vector<1x256xi32>
    %128 = arith.cmpi eq, %51, %127 : vector<1x256xi32>
    %cst_33 = arith.constant 0.000000e+00 : f32
    %129 = vector.broadcast %cst_33 : f32 to vector<1x256xf32>
    %130 = arith.select %128, %42, %129 : vector<1x256xi1>, vector<1x256xf32>
    %131 = arith.addf %126, %130 : vector<1x256xf32>
    %132 = vector.extract_strided_slice %25 {offsets = [0, 3], sizes = [32, 1], strides = [1, 1]} : vector<32x6xf32> to vector<32x1xf32>
    %133 = vector.broadcast %132 : vector<32x1xf32> to vector<32x256xf32>
    %134 = vector.broadcast %131 : vector<1x256xf32> to vector<32x256xf32>
    %135 = arith.mulf %133, %134 : vector<32x256xf32>
    %136 = arith.addf %114, %135 : vector<32x256xf32>
    %137 = vector.extract_strided_slice %26 {offsets = [0, 3], sizes = [1, 1], strides = [1, 1]} : vector<1x6xf32> to vector<1x1xf32>
    %138 = vector.broadcast %137 : vector<1x1xf32> to vector<1x256xf32>
    %139 = arith.mulf %138, %131 : vector<1x256xf32>
    %140 = arith.addf %118, %139 : vector<1x256xf32>
    %141 = vector.extract_strided_slice %27 {offsets = [0, 3], sizes = [1, 1], strides = [1, 1]} : vector<1x6xf32> to vector<1x1xf32>
    %142 = vector.broadcast %141 : vector<1x1xf32> to vector<1x256xf32>
    %143 = arith.mulf %142, %131 : vector<1x256xf32>
    %144 = arith.addf %122, %143 : vector<1x256xf32>
    %c4_i32_34 = arith.constant 4 : i32
    %145 = vector.broadcast %c4_i32_34 : i32 to vector<1x256xi32>
    %146 = arith.cmpi eq, %49, %145 : vector<1x256xi32>
    %cst_35 = arith.constant 0.000000e+00 : f32
    %147 = vector.broadcast %cst_35 : f32 to vector<1x256xf32>
    %148 = arith.select %146, %53, %147 : vector<1x256xi1>, vector<1x256xf32>
    %c4_i32_36 = arith.constant 4 : i32
    %149 = vector.broadcast %c4_i32_36 : i32 to vector<1x256xi32>
    %150 = arith.cmpi eq, %51, %149 : vector<1x256xi32>
    %cst_37 = arith.constant 0.000000e+00 : f32
    %151 = vector.broadcast %cst_37 : f32 to vector<1x256xf32>
    %152 = arith.select %150, %42, %151 : vector<1x256xi1>, vector<1x256xf32>
    %153 = arith.addf %148, %152 : vector<1x256xf32>
    %154 = vector.extract_strided_slice %25 {offsets = [0, 4], sizes = [32, 1], strides = [1, 1]} : vector<32x6xf32> to vector<32x1xf32>
    %155 = vector.broadcast %154 : vector<32x1xf32> to vector<32x256xf32>
    %156 = vector.broadcast %153 : vector<1x256xf32> to vector<32x256xf32>
    %157 = arith.mulf %155, %156 : vector<32x256xf32>
    %158 = arith.addf %136, %157 : vector<32x256xf32>
    %159 = vector.extract_strided_slice %26 {offsets = [0, 4], sizes = [1, 1], strides = [1, 1]} : vector<1x6xf32> to vector<1x1xf32>
    %160 = vector.broadcast %159 : vector<1x1xf32> to vector<1x256xf32>
    %161 = arith.mulf %160, %153 : vector<1x256xf32>
    %162 = arith.addf %140, %161 : vector<1x256xf32>
    %163 = vector.extract_strided_slice %27 {offsets = [0, 4], sizes = [1, 1], strides = [1, 1]} : vector<1x6xf32> to vector<1x1xf32>
    %164 = vector.broadcast %163 : vector<1x1xf32> to vector<1x256xf32>
    %165 = arith.mulf %164, %153 : vector<1x256xf32>
    %166 = arith.addf %144, %165 : vector<1x256xf32>
    %c5_i32 = arith.constant 5 : i32
    %167 = vector.broadcast %c5_i32 : i32 to vector<1x256xi32>
    %168 = arith.cmpi eq, %49, %167 : vector<1x256xi32>
    %cst_38 = arith.constant 0.000000e+00 : f32
    %169 = vector.broadcast %cst_38 : f32 to vector<1x256xf32>
    %170 = arith.select %168, %53, %169 : vector<1x256xi1>, vector<1x256xf32>
    %c5_i32_39 = arith.constant 5 : i32
    %171 = vector.broadcast %c5_i32_39 : i32 to vector<1x256xi32>
    %172 = arith.cmpi eq, %51, %171 : vector<1x256xi32>
    %cst_40 = arith.constant 0.000000e+00 : f32
    %173 = vector.broadcast %cst_40 : f32 to vector<1x256xf32>
    %174 = arith.select %172, %42, %173 : vector<1x256xi1>, vector<1x256xf32>
    %175 = arith.addf %170, %174 : vector<1x256xf32>
    %176 = vector.extract_strided_slice %25 {offsets = [0, 5], sizes = [32, 1], strides = [1, 1]} : vector<32x6xf32> to vector<32x1xf32>
    %177 = vector.broadcast %176 : vector<32x1xf32> to vector<32x256xf32>
    %178 = vector.broadcast %175 : vector<1x256xf32> to vector<32x256xf32>
    %179 = arith.mulf %177, %178 : vector<32x256xf32>
    %180 = arith.addf %158, %179 : vector<32x256xf32>
    %181 = vector.extract_strided_slice %26 {offsets = [0, 5], sizes = [1, 1], strides = [1, 1]} : vector<1x6xf32> to vector<1x1xf32>
    %182 = vector.broadcast %181 : vector<1x1xf32> to vector<1x256xf32>
    %183 = arith.mulf %182, %175 : vector<1x256xf32>
    %184 = arith.addf %162, %183 : vector<1x256xf32>
    %185 = vector.extract_strided_slice %27 {offsets = [0, 5], sizes = [1, 1], strides = [1, 1]} : vector<1x6xf32> to vector<1x1xf32>
    %186 = vector.broadcast %185 : vector<1x1xf32> to vector<1x256xf32>
    %187 = arith.mulf %186, %175 : vector<1x256xf32>
    %188 = arith.addf %166, %187 : vector<1x256xf32>
    %cst_41 = arith.constant 3.9269909E-4 : f32
    %189 = vector.broadcast %cst_41 : f32 to vector<1x256xf32>
    %190 = arith.mulf %189, %188 : vector<1x256xf32>
    %c0_42 = arith.constant 0 : index
    %c0_43 = arith.constant 0 : index
    %191 = vector.load %arg6[%c0_42, %c0_43] : memref<256x256xf32, #tpu.memory_space<vmem>>, vector<256x256xf32>
    %cst_44 = arith.constant dense<0.000000e+00> : vector<1x256xf32>
    %192 = tpu.matmul %190, %191, %cst_44 {dimension_numbers = #tpu.dot_dimension_numbers<[1], [0], [0], [1], [0, 0, 1, 1], [], []>} : vector<1x256xf32>, vector<256x256xf32>, vector<1x256xf32> -> vector<1x256xf32>
    %c0_45 = arith.constant 0 : index
    %193 = memref.load %arg8[%c0_45] : memref<1xf32, #tpu.memory_space<smem>>
    %194 = vector.broadcast %193 : f32 to vector<1x256xf32>
    %195 = arith.addf %192, %194 : vector<1x256xf32>
    %196 = vector.shape_cast %190 : vector<1x256xf32> to vector<1x1x256xf32>
    %cst_46 = arith.constant dense<0.000000e+00> : vector<1xf32>
    %197 = vector.multi_reduction <add>, %196, %cst_46 [1, 2] : vector<1x1x256xf32> to vector<1xf32>
    %198 = vector.shape_cast %197 : vector<1xf32> to vector<1x1x1xf32>
    %199 = vector.extract %198[0, 0, 0] : f32 from vector<1x1x1xf32>
    %200 = arith.addf %193, %199 : f32
    %cst_47 = arith.constant 0.159154937 : f32
    %201 = arith.mulf %200, %cst_47 : f32
    %202 = math.floor %201 : f32
    %cst_48 = arith.constant 6.28318548 : f32
    %203 = arith.mulf %cst_48, %202 : f32
    %204 = arith.subf %200, %203 : f32
    %c0_49 = arith.constant 0 : index
    %205 = memref.load %arg8[%c0_49] : memref<1xf32, #tpu.memory_space<smem>>
    memref.store %204, %arg8[%c0_49] : memref<1xf32, #tpu.memory_space<smem>>
    %cst_50 = arith.constant 0.159154937 : f32
    %206 = vector.broadcast %cst_50 : f32 to vector<1x256xf32>
    %207 = arith.mulf %195, %206 : vector<1x256xf32>
    %208 = math.floor %207 : vector<1x256xf32>
    %cst_51 = arith.constant 6.28318548 : f32
    %209 = vector.broadcast %cst_51 : f32 to vector<1x256xf32>
    %210 = arith.mulf %209, %208 : vector<1x256xf32>
    %211 = arith.subf %195, %210 : vector<1x256xf32>
    %212 = math.sin %211 : vector<1x256xf32>
    %213 = math.cos %211 : vector<1x256xf32>
    %cst_52 = arith.constant 2.000000e+00 : f32
    %214 = vector.broadcast %cst_52 : f32 to vector<1x256xf32>
    %215 = arith.mulf %214, %213 : vector<1x256xf32>
    %216 = vector.extract_strided_slice %180 {offsets = [0, 0], sizes = [1, 256], strides = [1, 1]} : vector<32x256xf32> to vector<1x256xf32>
    %217 = arith.mulf %216, %212 : vector<1x256xf32>
    %cst_53 = arith.constant 0.000000e+00 : f32
    %218 = vector.broadcast %cst_53 : f32 to vector<1x256xf32>
    %219 = arith.mulf %215, %212 : vector<1x256xf32>
    %220 = arith.subf %219, %218 : vector<1x256xf32>
    %221 = vector.extract_strided_slice %180 {offsets = [1, 0], sizes = [1, 256], strides = [1, 1]} : vector<32x256xf32> to vector<1x256xf32>
    %222 = arith.mulf %221, %220 : vector<1x256xf32>
    %223 = arith.addf %217, %222 : vector<1x256xf32>
    %224 = arith.mulf %215, %220 : vector<1x256xf32>
    %225 = arith.subf %224, %212 : vector<1x256xf32>
    %226 = vector.extract_strided_slice %180 {offsets = [2, 0], sizes = [1, 256], strides = [1, 1]} : vector<32x256xf32> to vector<1x256xf32>
    %227 = arith.mulf %226, %225 : vector<1x256xf32>
    %228 = arith.addf %223, %227 : vector<1x256xf32>
    %229 = arith.mulf %215, %225 : vector<1x256xf32>
    %230 = arith.subf %229, %220 : vector<1x256xf32>
    %231 = vector.extract_strided_slice %180 {offsets = [3, 0], sizes = [1, 256], strides = [1, 1]} : vector<32x256xf32> to vector<1x256xf32>
    %232 = arith.mulf %231, %230 : vector<1x256xf32>
    %233 = arith.addf %228, %232 : vector<1x256xf32>
    %234 = arith.mulf %215, %230 : vector<1x256xf32>
    %235 = arith.subf %234, %225 : vector<1x256xf32>
    %236 = vector.extract_strided_slice %180 {offsets = [4, 0], sizes = [1, 256], strides = [1, 1]} : vector<32x256xf32> to vector<1x256xf32>
    %237 = arith.mulf %236, %235 : vector<1x256xf32>
    %238 = arith.addf %233, %237 : vector<1x256xf32>
    %239 = arith.mulf %215, %235 : vector<1x256xf32>
    %240 = arith.subf %239, %230 : vector<1x256xf32>
    %241 = vector.extract_strided_slice %180 {offsets = [5, 0], sizes = [1, 256], strides = [1, 1]} : vector<32x256xf32> to vector<1x256xf32>
    %242 = arith.mulf %241, %240 : vector<1x256xf32>
    %243 = arith.addf %238, %242 : vector<1x256xf32>
    %244 = arith.mulf %215, %240 : vector<1x256xf32>
    %245 = arith.subf %244, %235 : vector<1x256xf32>
    %246 = vector.extract_strided_slice %180 {offsets = [6, 0], sizes = [1, 256], strides = [1, 1]} : vector<32x256xf32> to vector<1x256xf32>
    %247 = arith.mulf %246, %245 : vector<1x256xf32>
    %248 = arith.addf %243, %247 : vector<1x256xf32>
    %249 = arith.mulf %215, %245 : vector<1x256xf32>
    %250 = arith.subf %249, %240 : vector<1x256xf32>
    %251 = vector.extract_strided_slice %180 {offsets = [7, 0], sizes = [1, 256], strides = [1, 1]} : vector<32x256xf32> to vector<1x256xf32>
    %252 = arith.mulf %251, %250 : vector<1x256xf32>
    %253 = arith.addf %248, %252 : vector<1x256xf32>
    %254 = arith.mulf %215, %250 : vector<1x256xf32>
    %255 = arith.subf %254, %245 : vector<1x256xf32>
    %256 = vector.extract_strided_slice %180 {offsets = [8, 0], sizes = [1, 256], strides = [1, 1]} : vector<32x256xf32> to vector<1x256xf32>
    %257 = arith.mulf %256, %255 : vector<1x256xf32>
    %258 = arith.addf %253, %257 : vector<1x256xf32>
    %259 = arith.mulf %215, %255 : vector<1x256xf32>
    %260 = arith.subf %259, %250 : vector<1x256xf32>
    %261 = vector.extract_strided_slice %180 {offsets = [9, 0], sizes = [1, 256], strides = [1, 1]} : vector<32x256xf32> to vector<1x256xf32>
    %262 = arith.mulf %261, %260 : vector<1x256xf32>
    %263 = arith.addf %258, %262 : vector<1x256xf32>
    %264 = arith.mulf %215, %260 : vector<1x256xf32>
    %265 = arith.subf %264, %255 : vector<1x256xf32>
    %266 = vector.extract_strided_slice %180 {offsets = [10, 0], sizes = [1, 256], strides = [1, 1]} : vector<32x256xf32> to vector<1x256xf32>
    %267 = arith.mulf %266, %265 : vector<1x256xf32>
    %268 = arith.addf %263, %267 : vector<1x256xf32>
    %269 = arith.mulf %215, %265 : vector<1x256xf32>
    %270 = arith.subf %269, %260 : vector<1x256xf32>
    %271 = vector.extract_strided_slice %180 {offsets = [11, 0], sizes = [1, 256], strides = [1, 1]} : vector<32x256xf32> to vector<1x256xf32>
    %272 = arith.mulf %271, %270 : vector<1x256xf32>
    %273 = arith.addf %268, %272 : vector<1x256xf32>
    %274 = arith.mulf %215, %270 : vector<1x256xf32>
    %275 = arith.subf %274, %265 : vector<1x256xf32>
    %276 = vector.extract_strided_slice %180 {offsets = [12, 0], sizes = [1, 256], strides = [1, 1]} : vector<32x256xf32> to vector<1x256xf32>
    %277 = arith.mulf %276, %275 : vector<1x256xf32>
    %278 = arith.addf %273, %277 : vector<1x256xf32>
    %279 = arith.mulf %215, %275 : vector<1x256xf32>
    %280 = arith.subf %279, %270 : vector<1x256xf32>
    %281 = vector.extract_strided_slice %180 {offsets = [13, 0], sizes = [1, 256], strides = [1, 1]} : vector<32x256xf32> to vector<1x256xf32>
    %282 = arith.mulf %281, %280 : vector<1x256xf32>
    %283 = arith.addf %278, %282 : vector<1x256xf32>
    %284 = arith.mulf %215, %280 : vector<1x256xf32>
    %285 = arith.subf %284, %275 : vector<1x256xf32>
    %286 = vector.extract_strided_slice %180 {offsets = [14, 0], sizes = [1, 256], strides = [1, 1]} : vector<32x256xf32> to vector<1x256xf32>
    %287 = arith.mulf %286, %285 : vector<1x256xf32>
    %288 = arith.addf %283, %287 : vector<1x256xf32>
    %289 = arith.mulf %215, %285 : vector<1x256xf32>
    %290 = arith.subf %289, %280 : vector<1x256xf32>
    %291 = vector.extract_strided_slice %180 {offsets = [15, 0], sizes = [1, 256], strides = [1, 1]} : vector<32x256xf32> to vector<1x256xf32>
    %292 = arith.mulf %291, %290 : vector<1x256xf32>
    %293 = arith.addf %288, %292 : vector<1x256xf32>
    %294 = arith.mulf %215, %290 : vector<1x256xf32>
    %295 = arith.subf %294, %285 : vector<1x256xf32>
    %296 = vector.extract_strided_slice %180 {offsets = [16, 0], sizes = [1, 256], strides = [1, 1]} : vector<32x256xf32> to vector<1x256xf32>
    %297 = arith.mulf %296, %295 : vector<1x256xf32>
    %298 = arith.addf %293, %297 : vector<1x256xf32>
    %299 = arith.mulf %215, %295 : vector<1x256xf32>
    %300 = arith.subf %299, %290 : vector<1x256xf32>
    %301 = vector.extract_strided_slice %180 {offsets = [17, 0], sizes = [1, 256], strides = [1, 1]} : vector<32x256xf32> to vector<1x256xf32>
    %302 = arith.mulf %301, %300 : vector<1x256xf32>
    %303 = arith.addf %298, %302 : vector<1x256xf32>
    %304 = arith.mulf %215, %300 : vector<1x256xf32>
    %305 = arith.subf %304, %295 : vector<1x256xf32>
    %306 = vector.extract_strided_slice %180 {offsets = [18, 0], sizes = [1, 256], strides = [1, 1]} : vector<32x256xf32> to vector<1x256xf32>
    %307 = arith.mulf %306, %305 : vector<1x256xf32>
    %308 = arith.addf %303, %307 : vector<1x256xf32>
    %309 = arith.mulf %215, %305 : vector<1x256xf32>
    %310 = arith.subf %309, %300 : vector<1x256xf32>
    %311 = vector.extract_strided_slice %180 {offsets = [19, 0], sizes = [1, 256], strides = [1, 1]} : vector<32x256xf32> to vector<1x256xf32>
    %312 = arith.mulf %311, %310 : vector<1x256xf32>
    %313 = arith.addf %308, %312 : vector<1x256xf32>
    %314 = arith.mulf %215, %310 : vector<1x256xf32>
    %315 = arith.subf %314, %305 : vector<1x256xf32>
    %316 = vector.extract_strided_slice %180 {offsets = [20, 0], sizes = [1, 256], strides = [1, 1]} : vector<32x256xf32> to vector<1x256xf32>
    %317 = arith.mulf %316, %315 : vector<1x256xf32>
    %318 = arith.addf %313, %317 : vector<1x256xf32>
    %319 = arith.mulf %215, %315 : vector<1x256xf32>
    %320 = arith.subf %319, %310 : vector<1x256xf32>
    %321 = vector.extract_strided_slice %180 {offsets = [21, 0], sizes = [1, 256], strides = [1, 1]} : vector<32x256xf32> to vector<1x256xf32>
    %322 = arith.mulf %321, %320 : vector<1x256xf32>
    %323 = arith.addf %318, %322 : vector<1x256xf32>
    %324 = arith.mulf %215, %320 : vector<1x256xf32>
    %325 = arith.subf %324, %315 : vector<1x256xf32>
    %326 = vector.extract_strided_slice %180 {offsets = [22, 0], sizes = [1, 256], strides = [1, 1]} : vector<32x256xf32> to vector<1x256xf32>
    %327 = arith.mulf %326, %325 : vector<1x256xf32>
    %328 = arith.addf %323, %327 : vector<1x256xf32>
    %329 = arith.mulf %215, %325 : vector<1x256xf32>
    %330 = arith.subf %329, %320 : vector<1x256xf32>
    %331 = vector.extract_strided_slice %180 {offsets = [23, 0], sizes = [1, 256], strides = [1, 1]} : vector<32x256xf32> to vector<1x256xf32>
    %332 = arith.mulf %331, %330 : vector<1x256xf32>
    %333 = arith.addf %328, %332 : vector<1x256xf32>
    %334 = arith.mulf %215, %330 : vector<1x256xf32>
    %335 = arith.subf %334, %325 : vector<1x256xf32>
    %336 = vector.extract_strided_slice %180 {offsets = [24, 0], sizes = [1, 256], strides = [1, 1]} : vector<32x256xf32> to vector<1x256xf32>
    %337 = arith.mulf %336, %335 : vector<1x256xf32>
    %338 = arith.addf %333, %337 : vector<1x256xf32>
    %339 = arith.mulf %215, %335 : vector<1x256xf32>
    %340 = arith.subf %339, %330 : vector<1x256xf32>
    %341 = vector.extract_strided_slice %180 {offsets = [25, 0], sizes = [1, 256], strides = [1, 1]} : vector<32x256xf32> to vector<1x256xf32>
    %342 = arith.mulf %341, %340 : vector<1x256xf32>
    %343 = arith.addf %338, %342 : vector<1x256xf32>
    %344 = arith.mulf %215, %340 : vector<1x256xf32>
    %345 = arith.subf %344, %335 : vector<1x256xf32>
    %346 = vector.extract_strided_slice %180 {offsets = [26, 0], sizes = [1, 256], strides = [1, 1]} : vector<32x256xf32> to vector<1x256xf32>
    %347 = arith.mulf %346, %345 : vector<1x256xf32>
    %348 = arith.addf %343, %347 : vector<1x256xf32>
    %349 = arith.mulf %215, %345 : vector<1x256xf32>
    %350 = arith.subf %349, %340 : vector<1x256xf32>
    %351 = vector.extract_strided_slice %180 {offsets = [27, 0], sizes = [1, 256], strides = [1, 1]} : vector<32x256xf32> to vector<1x256xf32>
    %352 = arith.mulf %351, %350 : vector<1x256xf32>
    %353 = arith.addf %348, %352 : vector<1x256xf32>
    %354 = arith.mulf %215, %350 : vector<1x256xf32>
    %355 = arith.subf %354, %345 : vector<1x256xf32>
    %356 = vector.extract_strided_slice %180 {offsets = [28, 0], sizes = [1, 256], strides = [1, 1]} : vector<32x256xf32> to vector<1x256xf32>
    %357 = arith.mulf %356, %355 : vector<1x256xf32>
    %358 = arith.addf %353, %357 : vector<1x256xf32>
    %359 = arith.mulf %215, %355 : vector<1x256xf32>
    %360 = arith.subf %359, %350 : vector<1x256xf32>
    %361 = vector.extract_strided_slice %180 {offsets = [29, 0], sizes = [1, 256], strides = [1, 1]} : vector<32x256xf32> to vector<1x256xf32>
    %362 = arith.mulf %361, %360 : vector<1x256xf32>
    %363 = arith.addf %358, %362 : vector<1x256xf32>
    %364 = arith.mulf %215, %360 : vector<1x256xf32>
    %365 = arith.subf %364, %355 : vector<1x256xf32>
    %366 = vector.extract_strided_slice %180 {offsets = [30, 0], sizes = [1, 256], strides = [1, 1]} : vector<32x256xf32> to vector<1x256xf32>
    %367 = arith.mulf %366, %365 : vector<1x256xf32>
    %368 = arith.addf %363, %367 : vector<1x256xf32>
    %369 = arith.mulf %215, %365 : vector<1x256xf32>
    %370 = arith.subf %369, %360 : vector<1x256xf32>
    %371 = vector.extract_strided_slice %180 {offsets = [31, 0], sizes = [1, 256], strides = [1, 1]} : vector<32x256xf32> to vector<1x256xf32>
    %372 = arith.mulf %371, %370 : vector<1x256xf32>
    %373 = arith.addf %368, %372 : vector<1x256xf32>
    %374 = arith.mulf %373, %184 : vector<1x256xf32>
    %c0_54 = arith.constant 0 : index
    %c0_55 = arith.constant 0 : index
    %c0_56 = arith.constant 0 : index
    %375 = vector.load %arg7[%c0_54, %c0_55, %c0_56] : memref<1x1x256xf32, #tpu.memory_space<vmem>>, vector<1x1x256xf32>
    %376 = vector.shape_cast %375 : vector<1x1x256xf32> to vector<1x256xf32>
    %377 = vector.shape_cast %374 : vector<1x256xf32> to vector<1x1x256xf32>
    tpu.vector_store %arg7[%c0_54, %c0_55, %c0_56], %377 {strides = array<i32>} : memref<1x1x256xf32, #tpu.memory_space<vmem>>, vector<1x1x256xf32>,
    return
  }
  func.func @transform_0(%arg0: i32, %arg1: i32) -> (i32, i32, i32) {
    %c0_i32 = arith.constant 0 : i32
    %c0_i32_0 = arith.constant 0 : i32
    %c0_i32_1 = arith.constant 0 : i32
    return %arg0, %c0_i32, %c0_i32_0 : i32, i32, i32
  }
  func.func @transform_1(%arg0: i32, %arg1: i32) -> (i32, i32, i32) {
    %c0_i32 = arith.constant 0 : i32
    %c0_i32_0 = arith.constant 0 : i32
    %c0_i32_1 = arith.constant 0 : i32
    return %arg0, %c0_i32, %c0_i32_0 : i32, i32, i32
  }
  func.func @transform_2(%arg0: i32, %arg1: i32) -> (i32, i32, i32) {
    %c0_i32 = arith.constant 0 : i32
    %c0_i32_0 = arith.constant 0 : i32
    %c0_i32_1 = arith.constant 0 : i32
    return %arg0, %c0_i32, %c0_i32_0 : i32, i32, i32
  }
  func.func @transform_3(%arg0: i32, %arg1: i32) -> (i32, i32, i32) {
    %c0_i32 = arith.constant 0 : i32
    %c0_i32_0 = arith.constant 0 : i32
    %c0_i32_1 = arith.constant 0 : i32
    return %arg0, %c0_i32, %c0_i32_0 : i32, i32, i32
  }
  func.func @transform_4(%arg0: i32, %arg1: i32) -> (i32, i32) {
    %c0_i32 = arith.constant 0 : i32
    %c0_i32_0 = arith.constant 0 : i32
    %c0_i32_1 = arith.constant 0 : i32
    return %c0_i32, %c0_i32_0 : i32, i32
  }
  func.func @transform_5(%arg0: i32, %arg1: i32) -> (i32, i32, i32) {
    %c2_i32 = arith.constant 2 : i32
    %0 = arith.muli %arg0, %c2_i32 : i32
    %1 = arith.addi %0, %arg1 : i32
    %c0_i32 = arith.constant 0 : i32
    %c0_i32_0 = arith.constant 0 : i32
    %c0_i32_1 = arith.constant 0 : i32
    return %1, %c0_i32, %c0_i32_0 : i32, i32, i32
  }
}

</mosaic_0001>

<llo_original>
// kernel: tpu_custom_call.1
$region0: #{tpu_custom_call.1}
  #allocation0 [shape = 'u32[]', space=smem, size = 0x4, offset = 0x4, fixed_abs, tag = 'smem constant byte address 0x4 - core index']
  #allocation1 [shape = 'u32[72,128]{1,0:T(1,128)}', space=vmem, size = 0x9000, scoped, tag = 'internal scratch']
  #allocation2 [shape = 'f32[1]{0:T(128)}', space=smem, size = 0x200, scoped, tag = 'scratch operand']
  %s0 = inlined_call_operand.vmem [shape: f32[2,8,32], index: 0, kind: input, shape index: {}]
  %s1 = inlined_call_operand.vmem [shape: f32[2,8,1], index: 1, kind: input, shape index: {}]
  %s2 = inlined_call_operand.vmem [shape: f32[2,8,32], index: 2, kind: input, shape index: {}]
  %s3 = inlined_call_operand.vmem [shape: f32[2,8,1], index: 3, kind: input, shape index: {}]
  %s4 = inlined_call_operand.hbm [shape: f32[256,256], index: 4, kind: input, shape index: {}]
  %s5 = inlined_call_operand.hbm [shape: f32[4,1,256], index: 5, kind: output, shape index: {}]
  %s6 = sld [smem:[#allocation0]]
  $region61: #{tpu_custom_call.1} parent=0
    _
  %s8 = ssub.s32 1, %s6
  %s9 = scalar_select 0, %s8, %s6
  $region1: #{tpu_custom_call.1} parent=0
    #allocation3 [shape = 'u8[262144]{0}', space=vmem, size = 0x40000, scoped, tag = 'input window, operand 4, single buffered']
    #allocation4 [shape = 's32[2]{0}', space=sflag, size = 0x8, scoped, tag = 'scoped memory for tpu_custom_call.1']
    #allocation5 [shape = 's32[2]{0}', space=sflag, size = 0x8, scoped, tag = 'scoped memory for tpu_custom_call.1']
    #allocation6 [shape = 'u8[2048]{0}', space=vmem, size = 0x800, scoped, tag = 'output window, operand 0']
    %10 = vsyncpa [#allocation4], 0
    %11 = vsyncpa [#allocation5], 0
    %s12 = scalar_lea.sflag [#allocation5], 1
    %13 = vsyncpa %s12, 0
    loop: start=0, step=1, limit=6
    $region2: #{tpu_custom_call.1} parent=1 // loop_pre_header
      _
    $region3: #{tpu_custom_call.1} parent=1 // loop_header
      %s15 = sphi 0, %s19
      %p16 = scmp.ge.s32.totalorder %s15, 6
      %s22 = sphi 0, %s34
      %s23 = sphi 0, %s30
      %s24 = sphi 0, %s22
      %s25 = sphi 0, %s23
      %s26 = sphi 0, %s24
      %s27 = sphi 0, %s25
      %s37 = sphi 0, %s39
      %s40 = sphi 0, %s37
      %s41 = sphi 0, %s40
      %s57 = sphi 0, %s41
      %s63 = sphi 0, %s65
      %s66 = sphi 0, %s63
      %s67 = sphi 0, %s66
      %s83 = sphi 0, %s67
      %s89 = sphi 0, %s91
      %s92 = sphi 0, %s89
      %s93 = sphi 0, %s92
      %s109 = sphi 0, %s93
      %s115 = sphi 0, %s117
      %s118 = sphi 0, %s115
      %s119 = sphi 0, %s118
      %s135 = sphi 0, %s119
      %s139 = sphi 0, %s139
      %s141 = sphi 0, %s139
      %s142 = sphi 0, %s141
      %s156 = sphi 0, %s142
      %s166 = sphi 0, %s168
      %s169 = sphi 0, %s166
      %s170 = sphi 0, %s169
      %s186 = sphi 0, %s170
    $region4: #{tpu_custom_call.1} parent=1 // loop_header_branch
      %18 = sbr.rel (%p16) target = $region8
    $region5: #{tpu_custom_call.1} parent=1 // loop_body
      %s20 = ssub.s32 %s15, 1
      %s21 = ssub.s32 %s15, 2
      %s28 = sadd.s32 1, %s23
      %p29 = scmp.ge.s32.totalorder %s28, 2
      %s30 = scalar_select %p29, 0, %s28
      %s31 = sadd.s32 1, %s22
      %s32 = scalar_select %p29, %s31, %s22
      %p33 = scmp.ge.s32.totalorder %s32, 2
      %s34 = scalar_select %p33, 0, %s32
      %s35 = ssub.s32 %s22, %s34
      %p36 = scmp.eq.s32.totalorder %s35, 0
      %s38 = sadd.s32 %s37, 1
      %s39 = scalar_select %p36, %s37, %s38
      %p42 = pneg %p36
      %p43 = scmp.eq.s32.totalorder %s15, 3
      %p44 = por %p42, %p43
      %p45 = scmp.ne.s32.totalorder %s37, %s40
      %p46 = scmp.eq.s32.totalorder %s15, 0
      %p47 = por %p45, %p46
      %p48 = scmp.ne.s32.totalorder %s37, %s40
      %p49 = scmp.eq.s32.totalorder %s20, 3
      %p50 = por %p48, %p49
      %p51 = scmp.ne.s32.totalorder %s40, %s41
      %p52 = scmp.eq.s32.totalorder %s20, 0
      %p53 = por %p51, %p52
      %p54 = scmp.ne.s32.totalorder %s40, %s41
      %p55 = scmp.eq.s32.totalorder %s21, 3
      %p56 = por %p54, %p55
      %p58 = scmp.ne.s32.totalorder %s41, %s57
      %p59 = scmp.eq.s32.totalorder %s21, 0
      %p60 = por %p58, %p59
      %s61 = ssub.s32 %s22, %s34
      %p62 = scmp.eq.s32.totalorder %s61, 0
      %s64 = sadd.s32 %s63, 1
      %s65 = scalar_select %p62, %s63, %s64
      %p68 = pneg %p62
      %p69 = scmp.eq.s32.totalorder %s15, 3
      %p70 = por %p68, %p69
      %p71 = scmp.ne.s32.totalorder %s63, %s66
      %p72 = scmp.eq.s32.totalorder %s15, 0
      %p73 = por %p71, %p72
      %p74 = scmp.ne.s32.totalorder %s63, %s66
      %p75 = scmp.eq.s32.totalorder %s20, 3
      %p76 = por %p74, %p75
      %p77 = scmp.ne.s32.totalorder %s66, %s67
      %p78 = scmp.eq.s32.totalorder %s20, 0
      %p79 = por %p77, %p78
      %p80 = scmp.ne.s32.totalorder %s66, %s67
      %p81 = scmp.eq.s32.totalorder %s21, 3
      %p82 = por %p80, %p81
      %p84 = scmp.ne.s32.totalorder %s67, %s83
      %p85 = scmp.eq.s32.totalorder %s21, 0
      %p86 = por %p84, %p85
      %s87 = ssub.s32 %s22, %s34
      %p88 = scmp.eq.s32.totalorder %s87, 0
      %s90 = sadd.s32 %s89, 1
      %s91 = scalar_select %p88, %s89, %s90
      %p94 = pneg %p88
      %p95 = scmp.eq.s32.totalorder %s15, 3
      %p96 = por %p94, %p95
      %p97 = scmp.ne.s32.totalorder %s89, %s92
      %p98 = scmp.eq.s32.totalorder %s15, 0
      %p99 = por %p97, %p98
      %p100 = scmp.ne.s32.totalorder %s89, %s92
      %p101 = scmp.eq.s32.totalorder %s20, 3
      %p102 = por %p100, %p101
      %p103 = scmp.ne.s32.totalorder %s92, %s93
      %p104 = scmp.eq.s32.totalorder %s20, 0
      %p105 = por %p103, %p104
      %p106 = scmp.ne.s32.totalorder %s92, %s93
      %p107 = scmp.eq.s32.totalorder %s21, 3
      %p108 = por %p106, %p107
      %p110 = scmp.ne.s32.totalorder %s93, %s109
      %p111 = scmp.eq.s32.totalorder %s21, 0
      %p112 = por %p110, %p111
      %s113 = ssub.s32 %s22, %s34
      %p114 = scmp.eq.s32.totalorder %s113, 0
      %s116 = sadd.s32 %s115, 1
      %s117 = scalar_select %p114, %s115, %s116
      %p120 = pneg %p114
      %p121 = scmp.eq.s32.totalorder %s15, 3
      %p122 = por %p120, %p121
      %p123 = scmp.ne.s32.totalorder %s115, %s118
      %p124 = scmp.eq.s32.totalorder %s15, 0
      %p125 = por %p123, %p124
      %p126 = scmp.ne.s32.totalorder %s115, %s118
      %p127 = scmp.eq.s32.totalorder %s20, 3
      %p128 = por %p126, %p127
      %p129 = scmp.ne.s32.totalorder %s118, %s119
      %p130 = scmp.eq.s32.totalorder %s20, 0
      %p131 = por %p129, %p130
      %p132 = scmp.ne.s32.totalorder %s118, %s119
      %p133 = scmp.eq.s32.totalorder %s21, 3
      %p134 = por %p132, %p133
      %p136 = scmp.ne.s32.totalorder %s119, %s135
      %p137 = scmp.eq.s32.totalorder %s21, 0
      %p138 = por %p136, %p137
      %s140 = sadd.s32 %s139, 1
      %p143 = scmp.eq.s32.totalorder %s15, 3
      %p144 = scmp.ne.s32.totalorder %s139, %s141
      %p145 = scmp.eq.s32.totalorder %s15, 0
      %p146 = por %p144, %p145
      %p147 = scmp.ne.s32.totalorder %s139, %s141
      %p148 = scmp.eq.s32.totalorder %s20, 3
      %p149 = por %p147, %p148
      %p150 = scmp.ne.s32.totalorder %s141, %s142
      %p151 = scmp.eq.s32.totalorder %s20, 0
      %p152 = por %p150, %p151
      %p153 = scmp.ne.s32.totalorder %s141, %s142
      %p154 = scmp.eq.s32.totalorder %s21, 3
      %p155 = por %p153, %p154
      %p157 = scmp.ne.s32.totalorder %s142, %s156
      %p158 = scmp.eq.s32.totalorder %s21, 0
      %p159 = por %p157, %p158
      %s160 = smul.u32 %s22, 2
      %s161 = sadd.s32 %s160, %s23
      %s162 = smul.u32 %s34, 2
      %s163 = sadd.s32 %s162, %s30
      %s164 = ssub.s32 %s161, %s163
      %p165 = scmp.eq.s32.totalorder %s164, 0
      %s167 = sadd.s32 %s166, 1
      %s168 = scalar_select %p165, %s166, %s167
      %p171 = pneg %p165
      %p172 = scmp.eq.s32.totalorder %s15, 3
      %p173 = por %p171, %p172
      %p174 = scmp.ne.s32.totalorder %s166, %s169
      %p175 = scmp.eq.s32.totalorder %s15, 0
      %p176 = por %p174, %p175
      %p177 = scmp.ne.s32.totalorder %s166, %s169
      %p178 = scmp.eq.s32.totalorder %s20, 3
      %p179 = por %p177, %p178
      %p180 = scmp.ne.s32.totalorder %s169, %s170
      %p181 = scmp.eq.s32.totalorder %s20, 0
      %p182 = por %p180, %p181
      %p183 = scmp.ne.s32.totalorder %s169, %s170
      %p184 = scmp.eq.s32.totalorder %s21, 3
      %p185 = por %p183, %p184
      %p187 = scmp.ne.s32.totalorder %s170, %s186
      %p188 = scmp.eq.s32.totalorder %s21, 0
      %p189 = por %p187, %p188
      %p190 = scmp.le.s32.totalorder 1, %s15
      %p191 = scmp.lt.s32.totalorder %s15, 5
      %p192 = pnand %p190, %p191
      %p193 = pneg %p192
      // Predicated region
      $region9: #{tpu_custom_call.1} parent=5 // pred_check
        _
      $region10: #{tpu_custom_call.1} parent=5 // pred_check_branch
        %195 = sbr.rel (%p192) target = $region12
      $region11: #{tpu_custom_call.1} parent=5 // pred_region
        %s196 = ssub.s32 %s15, 1
        // Predicated region
        $region13: #{tpu_custom_call.1} parent=11 // pred_check
          %p197 = pneg %p152
        $region14: #{tpu_custom_call.1} parent=11 // pred_check_branch
          %199 = sbr.rel (%p197) target = $region16
        $region15: #{tpu_custom_call.1} parent=11 // pred_region
          %201 = vsyncadd [#allocation4], 0
          %s202 = sshll.u32 %s4, 4
          %s203 = int_to_ptr.hbm [resolvable:$true] %s202
          %s204 = sshll.u32 [#allocation3], 4
          %s205 = int_to_ptr.vmem [resolvable:$true] %s204
          %210 = dma.hbm_to_vmem [thread:$0]  %s203, 8192, %s205, [#allocation4], 256, 256, 16
        $region16: #{tpu_custom_call.1} parent=11 // pred_fallthru
          _
      $region12: #{tpu_custom_call.1} parent=5 // pred_fallthru
        _
      %p211 = scmp.lt.s32.totalorder %s15, 4
      // Predicated region
      $region17: #{tpu_custom_call.1} parent=5 // pred_check
        %p212 = pneg %p211
      $region18: #{tpu_custom_call.1} parent=5 // pred_check_branch
        %214 = sbr.rel (%p212) target = $region20
      $region19: #{tpu_custom_call.1} parent=5 // pred_region
        // Predicated region
        $region21: #{tpu_custom_call.1} parent=19 // pred_check
          %p215 = pneg %p47
        $region22: #{tpu_custom_call.1} parent=19 // pred_check_branch
          %217 = sbr.rel (%p215) target = $region24
        $region23: #{tpu_custom_call.1} parent=19 // pred_region
          %p218 = scmp.lt.s32.totalorder %s22, 1
          %s219 = scalar_select %p218, %s22, 1
          %s220 = smul.addr %s219, 8
          %s221 = scalar_lea.vmem %s0, %s220
        $region24: #{tpu_custom_call.1} parent=19 // pred_fallthru
          _
        // Predicated region
        $region25: #{tpu_custom_call.1} parent=19 // pred_check
          %p222 = pneg %p73
        $region26: #{tpu_custom_call.1} parent=19 // pred_check_branch
          %224 = sbr.rel (%p222) target = $region28
        $region27: #{tpu_custom_call.1} parent=19 // pred_region
          %p225 = scmp.lt.s32.totalorder %s22, 1
          %s226 = scalar_select %p225, %s22, 1
          %s227 = smul.addr %s226, 8
          %s228 = scalar_lea.vmem %s1, %s227
        $region28: #{tpu_custom_call.1} parent=19 // pred_fallthru
          _
        // Predicated region
        $region29: #{tpu_custom_call.1} parent=19 // pred_check
          %p229 = pneg %p99
        $region30: #{tpu_custom_call.1} parent=19 // pred_check_branch
          %231 = sbr.rel (%p229) target = $region32
        $region31: #{tpu_custom_call.1} parent=19 // pred_region
          %p232 = scmp.lt.s32.totalorder %s22, 1
          %s233 = scalar_select %p232, %s22, 1
          %s234 = smul.addr %s233, 8
          %s235 = scalar_lea.vmem %s2, %s234
        $region32: #{tpu_custom_call.1} parent=19 // pred_fallthru
          _
        // Predicated region
        $region33: #{tpu_custom_call.1} parent=19 // pred_check
          %p236 = pneg %p125
        $region34: #{tpu_custom_call.1} parent=19 // pred_check_branch
          %238 = sbr.rel (%p236) target = $region36
        $region35: #{tpu_custom_call.1} parent=19 // pred_region
          %p239 = scmp.lt.s32.totalorder %s22, 1
          %s240 = scalar_select %p239, %s22, 1
          %s241 = smul.addr %s240, 8
          %s242 = scalar_lea.vmem %s3, %s241
        $region36: #{tpu_custom_call.1} parent=19 // pred_fallthru
          _
      $region20: #{tpu_custom_call.1} parent=5 // pred_fallthru
        _
      %p243 = scmp.le.s32.totalorder 1, %s15
      %p244 = scmp.lt.s32.totalorder %s15, 5
      %p245 = pnand %p243, %p244
      %p246 = pneg %p245
      // Predicated region
      $region37: #{tpu_custom_call.1} parent=5 // pred_check
        _
      $region38: #{tpu_custom_call.1} parent=5 // pred_check_branch
        %248 = sbr.rel (%p245) target = $region40
      $region39: #{tpu_custom_call.1} parent=5 // pred_region
        %s249 = ssub.s32 %s15, 1
        // Predicated region
        $region41: #{tpu_custom_call.1} parent=39 // pred_check
          %p250 = pneg %p152
        $region42: #{tpu_custom_call.1} parent=39 // pred_check_branch
          %252 = sbr.rel (%p250) target = $region44
        $region43: #{tpu_custom_call.1} parent=39 // pred_region
          %254 = dma.done [#allocation4], 8192
        $region44: #{tpu_custom_call.1} parent=39 // pred_fallthru
          _
        %p255 = scmp.lt.s32.totalorder %s24, 1
        %s256 = scalar_select %p255, %s24, 1
        %s257 = smul.addr %s256, 8
        %s258 = scalar_lea.vmem %s0, %s257
        %p259 = pneg %p53
        %p260 = pneg %p50
        %p261 = scmp.lt.s32.totalorder %s24, 1
        %s262 = scalar_select %p261, %s24, 1
        %s263 = smul.addr %s262, 8
        %s264 = scalar_lea.vmem %s1, %s263
        %p265 = pneg %p79
        %p266 = pneg %p76
        %p267 = scmp.lt.s32.totalorder %s24, 1
        %s268 = scalar_select %p267, %s24, 1
        %s269 = smul.addr %s268, 8
        %s270 = scalar_lea.vmem %s2, %s269
        %p271 = pneg %p105
        %p272 = pneg %p102
        %p273 = scmp.lt.s32.totalorder %s24, 1
        %s274 = scalar_select %p273, %s24, 1
        %s275 = smul.addr %s274, 8
        %s276 = scalar_lea.vmem %s3, %s275
        %p277 = pneg %p131
        %p278 = pneg %p128
        %p279 = pneg %p152
        %p280 = pneg %p149
        %p281 = pneg %p182
        %p282 = pneg %p179
        %s283 = sand.u32 %s169, 1
        %s284 = scalar_lea.sflag [#allocation5], %s283
        %s285 = sand.u32 %s169, 1
        %s286 = smul.addr %s285, 2
        %s287 = scalar_lea.vmem [#allocation6], %s286
        %p288 = scmp.lt.s32.totalorder %s24, 1
        %s289 = scalar_select %p288, %s24, 1
        %s290 = smul.addr %s289, 8
        %s291 = scalar_lea.vmem %s0, %s290
        %p292 = scmp.lt.s32.totalorder %s24, 1
        %s293 = scalar_select %p292, %s24, 1
        %s294 = smul.addr %s293, 8
        %s295 = scalar_lea.vmem %s1, %s294
        %p296 = scmp.lt.s32.totalorder %s24, 1
        %s297 = scalar_select %p296, %s24, 1
        %s298 = smul.addr %s297, 8
        %s299 = scalar_lea.vmem %s2, %s298
        %p300 = scmp.lt.s32.totalorder %s24, 1
        %s301 = scalar_select %p300, %s24, 1
        %s302 = smul.addr %s301, 8
        %s303 = scalar_lea.vmem %s3, %s302
        %s304 = smul.u32 %s24, 2
        %s305 = sadd.s32 %s304, %s25
        %p306 = scmp.eq.s32.totalorder %s25, 0
        // Predicated region
        $region45: #{tpu_custom_call.1} parent=39 // pred_check
          %p307 = pneg %p306
        $region46: #{tpu_custom_call.1} parent=39 // pred_check_branch
          %309 = sbr.rel (%p307) target = $region48
        $region47: #{tpu_custom_call.1} parent=39 // pred_region
          %s310 = scalar_lea.smem [#allocation2], 0
          %311 = sst [smem:[%s310]] 0.0
        $region48: #{tpu_custom_call.1} parent=39 // pred_fallthru
          _
        %s312 = smul.u32 %s25, 4
        %s313 = ssub.s32 %s312, 1
        %p314 = scmp.gt.s32.totalorder %s313, 0
        %s315 = scalar_select %p314, %s313, 0
        %p316 = scmp.lt.s32.totalorder %s315, 2
        %s317 = scalar_select %p316, %s315, 2
        %s318 = scalar_lea.vmem %s291, %s317
        %v319 = vld [vmem:[%s318] sm:$0x3f]
        %s320 = scalar_lea.vmem %s299, %s317
        %v321 = vld [vmem:[%s320] sm:$0x3f]
        %s322 = scalar_lea.vmem %s295, %s317
        %v323 = vld [vmem:[%s322] sm:$0x3f]
        %s324 = scalar_lea.vmem %s303, %s317
        %v325 = vld [vmem:[%s324] sm:$0x3f]
        %327 = vset.pattern.permute.xlu0 0
        %328 = vperm.xlu0 %327, %v325
        %v329 = vpop.permute.xlu0 %328
        %v331 = vmul.f32 %v329, %v321
        %vm332 = vcmp.ge.f32.partialorder %v331, 8000.0
        %v333 = vsel %vm332, 0.0, %v319
        %334 = vxpose.xlu0.b32.start [1/16] %v333, 128
        %335 = vxpose.xlu0.b32.cont [2/16] 0.0, 128
        %336 = vxpose.xlu0.b32.cont [3/16] 0.0, 128
        %337 = vxpose.xlu0.b32.cont [4/16] 0.0, 128
        %338 = vxpose.xlu0.b32.cont [5/16] 0.0, 128
        %339 = vxpose.xlu0.b32.cont [6/16] 0.0, 128
        %340 = vxpose.xlu0.b32.cont [7/16] 0.0, 128
        %341 = vxpose.xlu0.b32.cont [8/16] 0.0, 128
        %342 = vxpose.xlu0.b32.cont [9/16] 0.0, 128
        %343 = vxpose.xlu0.b32.cont [10/16] 0.0, 128
        %344 = vxpose.xlu0.b32.cont [11/16] 0.0, 128
        %345 = vxpose.xlu0.b32.cont [12/16] 0.0, 128
        %346 = vxpose.xlu0.b32.cont [13/16] 0.0, 128
        %347 = vxpose.xlu0.b32.cont [14/16] 0.0, 128
        %348 = vxpose.xlu0.b32.cont [15/16] 0.0, 128
        %349 = vxpose.xlu0.b32.end [16/16] 0.0, 128
        %v350 = vpop.trf.xlu0
        %v351 = vpop.trf.xlu0
        %v352 = vpop.trf.xlu0
        %v353 = vpop.trf.xlu0
        %v354 = vpop.trf.xlu0
        %v355 = vpop.trf.xlu0
        %v356 = vpop.trf.xlu0
        %v357 = vpop.trf.xlu0
        %v358 = vpop.trf.xlu0
        %v359 = vpop.trf.xlu0
        %v360 = vpop.trf.xlu0
        %v361 = vpop.trf.xlu0
        %v362 = vpop.trf.xlu0
        %v363 = vpop.trf.xlu0
        %v364 = vpop.trf.xlu0
        %v365 = vpop.trf.xlu0
        %366 = vxpose.xlu0.b32.start [1/16] %v323, 128
        %367 = vxpose.xlu0.b32.cont [2/16] 0.0, 128
        %368 = vxpose.xlu0.b32.cont [3/16] 0.0, 128
        %369 = vxpose.xlu0.b32.cont [4/16] 0.0, 128
        %370 = vxpose.xlu0.b32.cont [5/16] 0.0, 128
        %371 = vxpose.xlu0.b32.cont [6/16] 0.0, 128
        %372 = vxpose.xlu0.b32.cont [7/16] 0.0, 128
        %373 = vxpose.xlu0.b32.cont [8/16] 0.0, 128
        %374 = vxpose.xlu0.b32.cont [9/16] 0.0, 128
        %375 = vxpose.xlu0.b32.cont [10/16] 0.0, 128
        %376 = vxpose.xlu0.b32.cont [11/16] 0.0, 128
        %377 = vxpose.xlu0.b32.cont [12/16] 0.0, 128
        %378 = vxpose.xlu0.b32.cont [13/16] 0.0, 128
        %379 = vxpose.xlu0.b32.cont [14/16] 0.0, 128
        %380 = vxpose.xlu0.b32.cont [15/16] 0.0, 128
        %381 = vxpose.xlu0.b32.end [16/16] 0.0, 128
        %v382 = vpop.trf.xlu0
        %v383 = vpop.trf.xlu0
        %v384 = vpop.trf.xlu0
        %v385 = vpop.trf.xlu0
        %v386 = vpop.trf.xlu0
        %v387 = vpop.trf.xlu0
        %v388 = vpop.trf.xlu0
        %v389 = vpop.trf.xlu0
        %v390 = vpop.trf.xlu0
        %v391 = vpop.trf.xlu0
        %v392 = vpop.trf.xlu0
        %v393 = vpop.trf.xlu0
        %v394 = vpop.trf.xlu0
        %v395 = vpop.trf.xlu0
        %v396 = vpop.trf.xlu0
        %v397 = vpop.trf.xlu0
        %398 = vxpose.xlu0.b32.start [1/16] %v325, 128
        %399 = vxpose.xlu0.b32.cont [2/16] 0.0, 128
        %400 = vxpose.xlu0.b32.cont [3/16] 0.0, 128
        %401 = vxpose.xlu0.b32.cont [4/16] 0.0, 128
        %402 = vxpose.xlu0.b32.cont [5/16] 0.0, 128
        %403 = vxpose.xlu0.b32.cont [6/16] 0.0, 128
        %404 = vxpose.xlu0.b32.cont [7/16] 0.0, 128
        %405 = vxpose.xlu0.b32.cont [8/16] 0.0, 128
        %406 = vxpose.xlu0.b32.cont [9/16] 0.0, 128
        %407 = vxpose.xlu0.b32.cont [10/16] 0.0, 128
        %408 = vxpose.xlu0.b32.cont [11/16] 0.0, 128
        %409 = vxpose.xlu0.b32.cont [12/16] 0.0, 128
        %410 = vxpose.xlu0.b32.cont [13/16] 0.0, 128
        %411 = vxpose.xlu0.b32.cont [14/16] 0.0, 128
        %412 = vxpose.xlu0.b32.cont [15/16] 0.0, 128
        %413 = vxpose.xlu0.b32.end [16/16] 0.0, 128
        %v414 = vpop.trf.xlu0
        %v415 = vpop.trf.xlu0
        %v416 = vpop.trf.xlu0
        %v417 = vpop.trf.xlu0
        %v418 = vpop.trf.xlu0
        %v419 = vpop.trf.xlu0
        %v420 = vpop.trf.xlu0
        %v421 = vpop.trf.xlu0
        %v422 = vpop.trf.xlu0
        %v423 = vpop.trf.xlu0
        %v424 = vpop.trf.xlu0
        %v425 = vpop.trf.xlu0
        %v426 = vpop.trf.xlu0
        %v427 = vpop.trf.xlu0
        %v428 = vpop.trf.xlu0
        %v429 = vpop.trf.xlu0
        %v430 = vlaneseq
        %v431 = vand.u32 %v430, 127
        %v432 = vadd.s32 %v431, 128
        %s433 = smul.u32 %s25, 256
        %v434 = vstv %s433
        %v435 = vadd.s32 %v434, %v431
        %v436 = vadd.s32 %v434, %v432
        %v437 = vcvt.s32.f32 %v435
        %v438 = vcvt.s32.f32 %v436
        %v439 = vadd.f32 %v437, 0.5
        %v440 = vadd.f32 %v438, 0.5
        %v441 = vrcp.pop 64.0
        %v442 = vmul.f32 64.0, %v441
        %v443 = vsub.f32 1.0, %v442
        %v444 = vmul.f32 %v441, %v443
        %v445 = vadd.f32 %v441, %v444
        %vm446 = vweird.f32 %v441
        %v447 = vsel %vm446, %v441, %v445
        %v448 = vmul.f32 %v439, %v447
        %v449 = vmul.f32 %v440, %v447
        %v450 = vsub.f32 %v448, 0.5
        %v451 = vsub.f32 %v449, 0.5
        %v452 = vmax.f32 %v450, 0.0
        %v453 = vmax.f32 %v451, 0.0
        %v454 = vfloor.f32 %v452
        %v455 = vfloor.f32 %v453
        %v456 = vsub.f32 %v452, %v454
        %v457 = vsub.f32 %v453, %v455
        %v458 = vcvt.f32.s32.to.zero.pseudo %v454
        %v459 = vcvt.f32.s32.to.zero.pseudo %v455
        %v460 = vadd.s32 %v458, 1
        %v461 = vadd.s32 %v459, 1
        %vm462 = vcmp.lt.s32.totalorder %v460, 7
        %v463 = vsel %vm462, %v460, 7
        %vm464 = vcmp.lt.s32.totalorder %v461, 7
        %v465 = vsel %vm464, %v461, 7
        %v466 = vstv %s317
        %v467 = vsub.s32 %v458, %v466
        %v468 = vsub.s32 %v459, %v466
        %v469 = vsub.s32 %v463, %v466
        %v470 = vsub.s32 %v465, %v466
        %v471 = vsub.f32 1.0, %v456
        %v472 = vsub.f32 1.0, %v457
        %vm473 = vcmp.eq.s32.totalorder %v467, 0
        %vm474 = vcmp.eq.s32.totalorder %v468, 0
        %v475 = vsel %vm473, %v471, 0.0
        %v476 = vsel %vm474, %v472, 0.0
        %vm477 = vcmp.eq.s32.totalorder %v469, 0
        %vm478 = vcmp.eq.s32.totalorder %v470, 0
        %v479 = vsel %vm477, %v456, 0.0
        %v480 = vsel %vm478, %v457, 0.0
        %v481 = vadd.f32 %v475, %v479
        %v482 = vadd.f32 %v476, %v480
        %484 = vset.pattern.permute.xlu0 0
        %485 = vperm.xlu0 %484, %v350
        %v486 = vpop.permute.xlu0 %485
        %489 = vset.pattern.permute.xlu0 0
        %490 = vperm.xlu0 %489, %v351
        %v491 = vpop.permute.xlu0 %490
        %494 = vset.pattern.permute.xlu0 0
        %495 = vperm.xlu0 %494, %v352
        %v496 = vpop.permute.xlu0 %495
        %499 = vset.pattern.permute.xlu0 0
        %500 = vperm.xlu0 %499, %v353
        %v501 = vpop.permute.xlu0 %500
        %v503 = vmul.f32 %v486, %v481
        %v504 = vmul.f32 %v486, %v482
        %v505 = vmul.f32 %v491, %v481
        %v506 = vmul.f32 %v491, %v482
        %v507 = vmul.f32 %v496, %v481
        %v508 = vmul.f32 %v496, %v482
        %v509 = vmul.f32 %v501, %v481
        %v510 = vmul.f32 %v501, %v482
        %v511 = vadd.f32 %v503, 0.0
        %v512 = vadd.f32 %v504, 0.0
        %v513 = vadd.f32 %v505, 0.0
        %v514 = vadd.f32 %v506, 0.0
        %v515 = vadd.f32 %v507, 0.0
        %v516 = vadd.f32 %v508, 0.0
        %v517 = vadd.f32 %v509, 0.0
        %v518 = vadd.f32 %v510, 0.0
        %520 = vset.pattern.permute.xlu0 0
        %521 = vperm.xlu0 %520, %v382
        %v522 = vpop.permute.xlu0 %521
        %v524 = vmul.f32 %v522, %v481
        %v525 = vmul.f32 %v522, %v482
        %v526 = vadd.f32 %v524, 0.0
        %v527 = vadd.f32 %v525, 0.0
        %529 = vset.pattern.permute.xlu0 0
        %530 = vperm.xlu0 %529, %v414
        %v531 = vpop.permute.xlu0 %530
        %v533 = vmul.f32 %v531, %v481
        %v534 = vmul.f32 %v531, %v482
        %v535 = vadd.f32 %v533, 0.0
        %v536 = vadd.f32 %v534, 0.0
        %vm537 = vcmp.eq.s32.totalorder %v467, 1
        %vm538 = vcmp.eq.s32.totalorder %v468, 1
        %v539 = vsel %vm537, %v471, 0.0
        %v540 = vsel %vm538, %v472, 0.0
        %vm541 = vcmp.eq.s32.totalorder %v469, 1
        %vm542 = vcmp.eq.s32.totalorder %v470, 1
        %v543 = vsel %vm541, %v456, 0.0
        %v544 = vsel %vm542, %v457, 0.0
        %v545 = vadd.f32 %v539, %v543
        %v546 = vadd.f32 %v540, %v544
        %547 = vset.pattern.permute.xlu0 1
        %548 = vperm.xlu0 %547, %v350
        %v549 = vpop.permute.xlu0 %548
        %551 = vset.pattern.permute.xlu0 1
        %552 = vperm.xlu0 %551, %v351
        %v553 = vpop.permute.xlu0 %552
        %555 = vset.pattern.permute.xlu0 1
        %556 = vperm.xlu0 %555, %v352
        %v557 = vpop.permute.xlu0 %556
        %559 = vset.pattern.permute.xlu0 1
        %560 = vperm.xlu0 %559, %v353
        %v561 = vpop.permute.xlu0 %560
        %v563 = vmul.f32 %v549, %v545
        %v564 = vmul.f32 %v549, %v546
        %v565 = vmul.f32 %v553, %v545
        %v566 = vmul.f32 %v553, %v546
        %v567 = vmul.f32 %v557, %v545
        %v568 = vmul.f32 %v557, %v546
        %v569 = vmul.f32 %v561, %v545
        %v570 = vmul.f32 %v561, %v546
        %v571 = vadd.f32 %v511, %v563
        %v572 = vadd.f32 %v512, %v564
        %v573 = vadd.f32 %v513, %v565
        %v574 = vadd.f32 %v514, %v566
        %v575 = vadd.f32 %v515, %v567
        %v576 = vadd.f32 %v516, %v568
        %v577 = vadd.f32 %v517, %v569
        %v578 = vadd.f32 %v518, %v570
        %579 = vset.pattern.permute.xlu0 1
        %580 = vperm.xlu0 %579, %v382
        %v581 = vpop.permute.xlu0 %580
        %v583 = vmul.f32 %v581, %v545
        %v584 = vmul.f32 %v581, %v546
        %v585 = vadd.f32 %v526, %v583
        %v586 = vadd.f32 %v527, %v584
        %587 = vset.pattern.permute.xlu0 1
        %588 = vperm.xlu0 %587, %v414
        %v589 = vpop.permute.xlu0 %588
        %v591 = vmul.f32 %v589, %v545
        %v592 = vmul.f32 %v589, %v546
        %v593 = vadd.f32 %v535, %v591
        %v594 = vadd.f32 %v536, %v592
        %vm595 = vcmp.eq.s32.totalorder %v467, 2
        %vm596 = vcmp.eq.s32.totalorder %v468, 2
        %v597 = vsel %vm595, %v471, 0.0
        %v598 = vsel %vm596, %v472, 0.0
        %vm599 = vcmp.eq.s32.totalorder %v469, 2
        %vm600 = vcmp.eq.s32.totalorder %v470, 2
        %v601 = vsel %vm599, %v456, 0.0
        %v602 = vsel %vm600, %v457, 0.0
        %v603 = vadd.f32 %v597, %v601
        %v604 = vadd.f32 %v598, %v602
        %605 = vset.pattern.permute.xlu0 2
        %606 = vperm.xlu0 %605, %v350
        %v607 = vpop.permute.xlu0 %606
        %609 = vset.pattern.permute.xlu0 2
        %610 = vperm.xlu0 %609, %v351
        %v611 = vpop.permute.xlu0 %610
        %613 = vset.pattern.permute.xlu0 2
        %614 = vperm.xlu0 %613, %v352
        %v615 = vpop.permute.xlu0 %614
        %617 = vset.pattern.permute.xlu0 2
        %618 = vperm.xlu0 %617, %v353
        %v619 = vpop.permute.xlu0 %618
        %v621 = vmul.f32 %v607, %v603
        %v622 = vmul.f32 %v607, %v604
        %v623 = vmul.f32 %v611, %v603
        %v624 = vmul.f32 %v611, %v604
        %v625 = vmul.f32 %v615, %v603
        %v626 = vmul.f32 %v615, %v604
        %v627 = vmul.f32 %v619, %v603
        %v628 = vmul.f32 %v619, %v604
        %v629 = vadd.f32 %v571, %v621
        %v630 = vadd.f32 %v572, %v622
        %v631 = vadd.f32 %v573, %v623
        %v632 = vadd.f32 %v574, %v624
        %v633 = vadd.f32 %v575, %v625
        %v634 = vadd.f32 %v576, %v626
        %v635 = vadd.f32 %v577, %v627
        %v636 = vadd.f32 %v578, %v628
        %637 = vset.pattern.permute.xlu0 2
        %638 = vperm.xlu0 %637, %v382
        %v639 = vpop.permute.xlu0 %638
        %v641 = vmul.f32 %v639, %v603
        %v642 = vmul.f32 %v639, %v604
        %v643 = vadd.f32 %v585, %v641
        %v644 = vadd.f32 %v586, %v642
        %645 = vset.pattern.permute.xlu0 2
        %646 = vperm.xlu0 %645, %v414
        %v647 = vpop.permute.xlu0 %646
        %v649 = vmul.f32 %v647, %v603
        %v650 = vmul.f32 %v647, %v604
        %v651 = vadd.f32 %v593, %v649
        %v652 = vadd.f32 %v594, %v650
        %vm653 = vcmp.eq.s32.totalorder %v467, 3
        %vm654 = vcmp.eq.s32.totalorder %v468, 3
        %v655 = vsel %vm653, %v471, 0.0
        %v656 = vsel %vm654, %v472, 0.0
        %vm657 = vcmp.eq.s32.totalorder %v469, 3
        %vm658 = vcmp.eq.s32.totalorder %v470, 3
        %v659 = vsel %vm657, %v456, 0.0
        %v660 = vsel %vm658, %v457, 0.0
        %v661 = vadd.f32 %v655, %v659
        %v662 = vadd.f32 %v656, %v660
        %663 = vset.pattern.permute.xlu0 3
        %664 = vperm.xlu0 %663, %v350
        %v665 = vpop.permute.xlu0 %664
        %667 = vset.pattern.permute.xlu0 3
        %668 = vperm.xlu0 %667, %v351
        %v669 = vpop.permute.xlu0 %668
        %671 = vset.pattern.permute.xlu0 3
        %672 = vperm.xlu0 %671, %v352
        %v673 = vpop.permute.xlu0 %672
        %675 = vset.pattern.permute.xlu0 3
        %676 = vperm.xlu0 %675, %v353
        %v677 = vpop.permute.xlu0 %676
        %v679 = vmul.f32 %v665, %v661
        %v680 = vmul.f32 %v665, %v662
        %v681 = vmul.f32 %v669, %v661
        %v682 = vmul.f32 %v669, %v662
        %v683 = vmul.f32 %v673, %v661
        %v684 = vmul.f32 %v673, %v662
        %v685 = vmul.f32 %v677, %v661
        %v686 = vmul.f32 %v677, %v662
        %v687 = vadd.f32 %v629, %v679
        %v688 = vadd.f32 %v630, %v680
        %v689 = vadd.f32 %v631, %v681
        %v690 = vadd.f32 %v632, %v682
        %v691 = vadd.f32 %v633, %v683
        %v692 = vadd.f32 %v634, %v684
        %v693 = vadd.f32 %v635, %v685
        %v694 = vadd.f32 %v636, %v686
        %695 = vset.pattern.permute.xlu0 3
        %696 = vperm.xlu0 %695, %v382
        %v697 = vpop.permute.xlu0 %696
        %v699 = vmul.f32 %v697, %v661
        %v700 = vmul.f32 %v697, %v662
        %v701 = vadd.f32 %v643, %v699
        %v702 = vadd.f32 %v644, %v700
        %703 = vset.pattern.permute.xlu0 3
        %704 = vperm.xlu0 %703, %v414
        %v705 = vpop.permute.xlu0 %704
        %v707 = vmul.f32 %v705, %v661
        %v708 = vmul.f32 %v705, %v662
        %v709 = vadd.f32 %v651, %v707
        %v710 = vadd.f32 %v652, %v708
        %vm711 = vcmp.eq.s32.totalorder %v467, 4
        %vm712 = vcmp.eq.s32.totalorder %v468, 4
        %v713 = vsel %vm711, %v471, 0.0
        %v714 = vsel %vm712, %v472, 0.0
        %vm715 = vcmp.eq.s32.totalorder %v469, 4
        %vm716 = vcmp.eq.s32.totalorder %v470, 4
        %v717 = vsel %vm715, %v456, 0.0
        %v718 = vsel %vm716, %v457, 0.0
        %v719 = vadd.f32 %v713, %v717
        %v720 = vadd.f32 %v714, %v718
        %721 = vset.pattern.permute.xlu0 4
        %722 = vperm.xlu0 %721, %v350
        %v723 = vpop.permute.xlu0 %722
        %725 = vset.pattern.permute.xlu0 4
        %726 = vperm.xlu0 %725, %v351
        %v727 = vpop.permute.xlu0 %726
        %729 = vset.pattern.permute.xlu0 4
        %730 = vperm.xlu0 %729, %v352
        %v731 = vpop.permute.xlu0 %730
        %733 = vset.pattern.permute.xlu0 4
        %734 = vperm.xlu0 %733, %v353
        %v735 = vpop.permute.xlu0 %734
        %v737 = vmul.f32 %v723, %v719
        %v738 = vmul.f32 %v723, %v720
        %v739 = vmul.f32 %v727, %v719
        %v740 = vmul.f32 %v727, %v720
        %v741 = vmul.f32 %v731, %v719
        %v742 = vmul.f32 %v731, %v720
        %v743 = vmul.f32 %v735, %v719
        %v744 = vmul.f32 %v735, %v720
        %v745 = vadd.f32 %v687, %v737
        %v746 = vadd.f32 %v688, %v738
        %v747 = vadd.f32 %v689, %v739
        %v748 = vadd.f32 %v690, %v740
        %v749 = vadd.f32 %v691, %v741
        %v750 = vadd.f32 %v692, %v742
        %v751 = vadd.f32 %v693, %v743
        %v752 = vadd.f32 %v694, %v744
        %753 = vset.pattern.permute.xlu0 4
        %754 = vperm.xlu0 %753, %v382
        %v755 = vpop.permute.xlu0 %754
        %v757 = vmul.f32 %v755, %v719
        %v758 = vmul.f32 %v755, %v720
        %v759 = vadd.f32 %v701, %v757
        %v760 = vadd.f32 %v702, %v758
        %761 = vset.pattern.permute.xlu0 4
        %762 = vperm.xlu0 %761, %v414
        %v763 = vpop.permute.xlu0 %762
        %v765 = vmul.f32 %v763, %v719
        %v766 = vmul.f32 %v763, %v720
        %v767 = vadd.f32 %v709, %v765
        %v768 = vadd.f32 %v710, %v766
        %vm769 = vcmp.eq.s32.totalorder %v467, 5
        %vm770 = vcmp.eq.s32.totalorder %v468, 5
        %v771 = vsel %vm769, %v471, 0.0
        %v772 = vsel %vm770, %v472, 0.0
        %vm773 = vcmp.eq.s32.totalorder %v469, 5
        %vm774 = vcmp.eq.s32.totalorder %v470, 5
        %v775 = vsel %vm773, %v456, 0.0
        %v776 = vsel %vm774, %v457, 0.0
        %v777 = vadd.f32 %v771, %v775
        %v778 = vadd.f32 %v772, %v776
        %779 = vset.pattern.permute.xlu0 5
        %780 = vperm.xlu0 %779, %v350
        %v781 = vpop.permute.xlu0 %780
        %783 = vset.pattern.permute.xlu0 5
        %784 = vperm.xlu0 %783, %v351
        %v785 = vpop.permute.xlu0 %784
        %787 = vset.pattern.permute.xlu0 5
        %788 = vperm.xlu0 %787, %v352
        %v789 = vpop.permute.xlu0 %788
        %791 = vset.pattern.permute.xlu0 5
        %792 = vperm.xlu0 %791, %v353
        %v793 = vpop.permute.xlu0 %792
        %v795 = vmul.f32 %v781, %v777
        %v796 = vmul.f32 %v781, %v778
        %v797 = vmul.f32 %v785, %v777
        %v798 = vmul.f32 %v785, %v778
        %v799 = vmul.f32 %v789, %v777
        %v800 = vmul.f32 %v789, %v778
        %v801 = vmul.f32 %v793, %v777
        %v802 = vmul.f32 %v793, %v778
        %v803 = vadd.f32 %v745, %v795
        %v804 = vadd.f32 %v746, %v796
        %v805 = vadd.f32 %v747, %v797
        %v806 = vadd.f32 %v748, %v798
        %v807 = vadd.f32 %v749, %v799
        %v808 = vadd.f32 %v750, %v800
        %v809 = vadd.f32 %v751, %v801
        %v810 = vadd.f32 %v752, %v802
        %811 = vset.pattern.permute.xlu0 5
        %812 = vperm.xlu0 %811, %v382
        %v813 = vpop.permute.xlu0 %812
        %v815 = vmul.f32 %v813, %v777
        %v816 = vmul.f32 %v813, %v778
        %v817 = vadd.f32 %v759, %v815
        %v818 = vadd.f32 %v760, %v816
        %819 = vset.pattern.permute.xlu0 5
        %820 = vperm.xlu0 %819, %v414
        %v821 = vpop.permute.xlu0 %820
        %v823 = vmul.f32 %v821, %v777
        %v824 = vmul.f32 %v821, %v778
        %v825 = vadd.f32 %v767, %v823
        %v826 = vadd.f32 %v768, %v824
        %v827 = vmul.f32 %v825, 0.0003926991
        %v828 = vmul.f32 %v826, 0.0003926991
        %v829 = vld [vmem:[#allocation3] sm:$0xff]
        %v830 = vld [vmem:[#allocation3 + $0x8] sm:$0xff]
        %v831 = vld [vmem:[#allocation3 + $0x10] sm:$0xff]
        %v832 = vld [vmem:[#allocation3 + $0x18] sm:$0xff]
        %v833 = vld [vmem:[#allocation3 + $0x20] sm:$0xff]
        %v834 = vld [vmem:[#allocation3 + $0x28] sm:$0xff]
        %v835 = vld [vmem:[#allocation3 + $0x30] sm:$0xff]
        %v836 = vld [vmem:[#allocation3 + $0x38] sm:$0xff]
        %v837 = vld [vmem:[#allocation3 + $0x40] sm:$0xff]
        %v838 = vld [vmem:[#allocation3 + $0x48] sm:$0xff]
        %v839 = vld [vmem:[#allocation3 + $0x50] sm:$0xff]
        %v840 = vld [vmem:[#allocation3 + $0x58] sm:$0xff]
        %v841 = vld [vmem:[#allocation3 + $0x60] sm:$0xff]
        %v842 = vld [vmem:[#allocation3 + $0x68] sm:$0xff]
        %v843 = vld [vmem:[#allocation3 + $0x70] sm:$0xff]
        %v844 = vld [vmem:[#allocation3 + $0x78] sm:$0xff]
        %v845 = vld [vmem:[#allocation3 + $0x80] sm:$0xff]
        %v846 = vld [vmem:[#allocation3 + $0x88] sm:$0xff]
        %v847 = vld [vmem:[#allocation3 + $0x90] sm:$0xff]
        %v848 = vld [vmem:[#allocation3 + $0x98] sm:$0xff]
        %v849 = vld [vmem:[#allocation3 + $0xa0] sm:$0xff]
        %v850 = vld [vmem:[#allocation3 + $0xa8] sm:$0xff]
        %v851 = vld [vmem:[#allocation3 + $0xb0] sm:$0xff]
        %v852 = vld [vmem:[#allocation3 + $0xb8] sm:$0xff]
        %v853 = vld [vmem:[#allocation3 + $0xc0] sm:$0xff]
        %v854 = vld [vmem:[#allocation3 + $0xc8] sm:$0xff]
        %v855 = vld [vmem:[#allocation3 + $0xd0] sm:$0xff]
        %v856 = vld [vmem:[#allocation3 + $0xd8] sm:$0xff]
        %v857 = vld [vmem:[#allocation3 + $0xe0] sm:$0xff]
        %v858 = vld [vmem:[#allocation3 + $0xe8] sm:$0xff]
        %v859 = vld [vmem:[#allocation3 + $0xf0] sm:$0xff]
        %v860 = vld [vmem:[#allocation3 + $0xf8] sm:$0xff]
        %v861 = vld [vmem:[#allocation3 + $0x100] sm:$0xff]
        %v862 = vld [vmem:[#allocation3 + $0x108] sm:$0xff]
        %v863 = vld [vmem:[#allocation3 + $0x110] sm:$0xff]
        %v864 = vld [vmem:[#allocation3 + $0x118] sm:$0xff]
        %v865 = vld [vmem:[#allocation3 + $0x120] sm:$0xff]
        %v866 = vld [vmem:[#allocation3 + $0x128] sm:$0xff]
        %v867 = vld [vmem:[#allocation3 + $0x130] sm:$0xff]
        %v868 = vld [vmem:[#allocation3 + $0x138] sm:$0xff]
        %v869 = vld [vmem:[#allocation3 + $0x140] sm:$0xff]
        %v870 = vld [vmem:[#allocation3 + $0x148] sm:$0xff]
        %v871 = vld [vmem:[#allocation3 + $0x150] sm:$0xff]
        %v872 = vld [vmem:[#allocation3 + $0x158] sm:$0xff]
        %v873 = vld [vmem:[#allocation3 + $0x160] sm:$0xff]
        %v874 = vld [vmem:[#allocation3 + $0x168] sm:$0xff]
        %v875 = vld [vmem:[#allocation3 + $0x170] sm:$0xff]
        %v876 = vld [vmem:[#allocation3 + $0x178] sm:$0xff]
        %v877 = vld [vmem:[#allocation3 + $0x180] sm:$0xff]
        %v878 = vld [vmem:[#allocation3 + $0x188] sm:$0xff]
        %v879 = vld [vmem:[#allocation3 + $0x190] sm:$0xff]
        %v880 = vld [vmem:[#allocation3 + $0x198] sm:$0xff]
        %v881 = vld [vmem:[#allocation3 + $0x1a0] sm:$0xff]
        %v882 = vld [vmem:[#allocation3 + $0x1a8] sm:$0xff]
        %v883 = vld [vmem:[#allocation3 + $0x1b0] sm:$0xff]
        %v884 = vld [vmem:[#allocation3 + $0x1b8] sm:$0xff]
        %v885 = vld [vmem:[#allocation3 + $0x1c0] sm:$0xff]
        %v886 = vld [vmem:[#allocation3 + $0x1c8] sm:$0xff]
        %v887 = vld [vmem:[#allocation3 + $0x1d0] sm:$0xff]
        %v888 = vld [vmem:[#allocation3 + $0x1d8] sm:$0xff]
        %v889 = vld [vmem:[#allocation3 + $0x1e0] sm:$0xff]
        %v890 = vld [vmem:[#allocation3 + $0x1e8] sm:$0xff]
        %v891 = vld [vmem:[#allocation3 + $0x1f0] sm:$0xff]
        %v892 = vld [vmem:[#allocation3 + $0x1f8] sm:$0xff]
        %s893 = sld [smem:[#allocation2]]
        %v894 = vstv %s893
        %895 = vmatpush.msra.mxu0 %v859
        %896 = vmatpush.msra.mxu0 %v857
        %897 = vmatpush.msra.mxu0 %v855
        %898 = vmatpush.msra.mxu0 %v853
        %899 = vmatpush.msra.mxu0 %v851
        %900 = vmatpush.msra.mxu0 %v849
        %901 = vmatpush.msra.mxu0 %v847
        %902 = vmatpush.msra.mxu0 %v845
        %903 = vmatpush.msra.mxu0 %v843
        %904 = vmatpush.msra.mxu0 %v841
        %905 = vmatpush.msra.mxu0 %v839
        %906 = vmatpush.msra.mxu0 %v837
        %907 = vmatpush.msra.mxu0 %v835
        %908 = vmatpush.msra.mxu0 %v833
        %909 = vmatpush.msra.mxu0 %v831
        %910 = vmatpush.msra.mxu0 %v829
        %911 = vmatmul.f32.gmra.mxu0 %v827
        %v912 = vpop.f32.mrf.mxu0
        %v913 = vadd.f32 %v894, %v912
        %914 = vdwg.mxu0
        %915 = vmatpush.msra.mxu0 %v891
        %916 = vmatpush.msra.mxu0 %v889
        %917 = vmatpush.msra.mxu0 %v887
        %918 = vmatpush.msra.mxu0 %v885
        %919 = vmatpush.msra.mxu0 %v883
        %920 = vmatpush.msra.mxu0 %v881
        %921 = vmatpush.msra.mxu0 %v879
        %922 = vmatpush.msra.mxu0 %v877
        %923 = vmatpush.msra.mxu0 %v875
        %924 = vmatpush.msra.mxu0 %v873
        %925 = vmatpush.msra.mxu0 %v871
        %926 = vmatpush.msra.mxu0 %v869
        %927 = vmatpush.msra.mxu0 %v867
        %928 = vmatpush.msra.mxu0 %v865
        %929 = vmatpush.msra.mxu0 %v863
        %930 = vmatpush.msra.mxu0 %v861
        %931 = vmatmul.f32.gmra.mxu0 %v828
        %v932 = vpop.f32.mrf.mxu0
        %v933 = vadd.f32 %v913, %v932
        %934 = vdwg.mxu0
        %935 = vmatpush.msra.mxu0 %v860
        %936 = vmatpush.msra.mxu0 %v858
        %937 = vmatpush.msra.mxu0 %v856
        %938 = vmatpush.msra.mxu0 %v854
        %939 = vmatpush.msra.mxu0 %v852
        %940 = vmatpush.msra.mxu0 %v850
        %941 = vmatpush.msra.mxu0 %v848
        %942 = vmatpush.msra.mxu0 %v846
        %943 = vmatpush.msra.mxu0 %v844
        %944 = vmatpush.msra.mxu0 %v842
        %945 = vmatpush.msra.mxu0 %v840
        %946 = vmatpush.msra.mxu0 %v838
        %947 = vmatpush.msra.mxu0 %v836
        %948 = vmatpush.msra.mxu0 %v834
        %949 = vmatpush.msra.mxu0 %v832
        %950 = vmatpush.msra.mxu0 %v830
        %951 = vmatmul.f32.gmra.mxu0 %v827
        %v952 = vpop.f32.mrf.mxu0
        %v953 = vadd.f32 %v894, %v952
        %954 = vdwg.mxu0
        %955 = vmatpush.msra.mxu0 %v892
        %956 = vmatpush.msra.mxu0 %v890
        %957 = vmatpush.msra.mxu0 %v888
        %958 = vmatpush.msra.mxu0 %v886
        %959 = vmatpush.msra.mxu0 %v884
        %960 = vmatpush.msra.mxu0 %v882
        %961 = vmatpush.msra.mxu0 %v880
        %962 = vmatpush.msra.mxu0 %v878
        %963 = vmatpush.msra.mxu0 %v876
        %964 = vmatpush.msra.mxu0 %v874
        %965 = vmatpush.msra.mxu0 %v872
        %966 = vmatpush.msra.mxu0 %v870
        %967 = vmatpush.msra.mxu0 %v868
        %968 = vmatpush.msra.mxu0 %v866
        %969 = vmatpush.msra.mxu0 %v864
        %970 = vmatpush.msra.mxu0 %v862
        %971 = vmatmul.f32.gmra.mxu0 %v828
        %v972 = vpop.f32.mrf.mxu0
        %v973 = vadd.f32 %v953, %v972
        %974 = vdwg.mxu0
        %vm975 = vcmask 1040384
        %v976 = vsel %vm975, %v827, 0.0
        %v977 = vsel %vm975, %v828, 0.0
        %v978 = vadd.f32 %v976, %v977
        %979 = vadd.xlane.f32.xlu0 %v978
        %v980 = vpop.xlane.xlu0 %979
        %v981 = vrot.slane %v980, 4
        %v982 = vadd.f32 %v980, %v981
        %v983 = vrot.slane %v982, 2
        %v984 = vadd.f32 %v982, %v983
        %v985 = vrot.slane %v984, 1
        %v986 = vadd.f32 %v984, %v985
        %s987 = vtos %v986
        %s988 = sadd.f32 %s893, %s987
        %s989 = smul.f32 %s988, 0.15915494
        %s990 = sfloor.f32 %s989
        %s991 = smul.f32 %s990, 6.2831855
        %s992 = ssub.f32 %s988, %s991
        %s993 = scalar_lea.smem [#allocation2], 0
        %994 = sst [smem:[%s993]] %s992
        %v995 = vmul.f32 %v933, 0.15915494
        %v996 = vmul.f32 %v973, 0.15915494
        %v997 = vfloor.f32 %v995
        %v998 = vfloor.f32 %v996
        %v999 = vmul.f32 %v997, 6.2831855
        %v1000 = vmul.f32 %v998, 6.2831855
        %v1001 = vsub.f32 %v933, %v999
        %v1002 = vsub.f32 %v973, %v1000
        %v1003 = vand.u32 2147483647, %v1001
        %vm1004 = vcmp.le.f32.partialorder %v1003, 0.7853982
        %vm1005 = vcmp.lt.s32.totalorder %v1001, 0
        %v1006 = vand.u32 %v1001, 2139095040
        %v1007 = vshrl.u32 %v1006, 23
        %v1008 = vsub.s32 %v1007, 127
        %v1009 = vand.u32 2147483647, %v1001
        %v1010 = vand.u32 %v1009, 8388607
        %v1011 = vor.u32 %v1010, 8388608
        %v1012 = vsub.s32 0, %v1011
        %v1013 = vadd.s32 %v1008, 1
        %vm1014 = vcmp.gt.s32.totalorder %v1013, 0
        %v1015 = vsel %vm1014, %v1013, 0
        %v1016 = vshrl.u32 %v1015, 5
        %v1017 = vand.u32 %v1015, 31
        %v1018 = vsub.s32 32, %v1017
        %v1019 = vshrl.u32 683565275, %v1018
        %v1020 = vshll.u32 683565275, %v1017
        %v1021 = vshrl.u32 2475754826, %v1018
        %v1022 = vor.u32 %v1020, %v1021
        %v1023 = vshll.u32 2475754826, %v1017
        %v1024 = vshrl.u32 2131351028, %v1018
        %v1025 = vor.u32 %v1023, %v1024
        %v1026 = vshll.u32 2131351028, %v1017
        %v1027 = vshrl.u32 2102212464, %v1018
        %v1028 = vor.u32 %v1026, %v1027
        %v1029 = vshll.u32 2102212464, %v1017
        %v1030 = vshrl.u32 920167782, %v1018
        %v1031 = vor.u32 %v1029, %v1030
        %v1032 = vshll.u32 920167782, %v1017
        %v1033 = vshrl.u32 1326507024, %v1018
        %v1034 = vor.u32 %v1032, %v1033
        %vm1035 = vcmp.lt.s32.totalorder %v1016, 1
        %vm1036 = vcmp.lt.s32.totalorder %v1016, 2
        %vm1037 = vcmp.lt.s32.totalorder %v1016, 3
        %vm1038 = vcmp.lt.s32.totalorder %v1016, 4
        %v1039 = vsel %vm1035, %v1019, %v1022
        %v1040 = vsel %vm1038, %v1028, 2102212464
        %v1041 = vsel %vm1037, %v1025, %v1040
        %v1042 = vsel %vm1036, %v1039, %v1041
        %v1043 = vsel %vm1035, %v1022, %v1025
        %v1044 = vsel %vm1038, %v1031, 920167782
        %v1045 = vsel %vm1037, %v1028, %v1044
        %v1046 = vsel %vm1036, %v1043, %v1045
        %v1047 = vsel %vm1035, %v1025, %v1028
        %v1048 = vsel %vm1038, %v1034, 1326507024
        %v1049 = vsel %vm1037, %v1031, %v1048
        %v1050 = vsel %vm1036, %v1047, %v1049
        %v1051 = vshll.u32 %v1011, 8
        %v1052 = vand.u32 %v1051, 65535
        %v1053 = vshrl.u32 %v1051, 16
        %v1054 = vand.u32 %v1050, 65535
        %v1055 = vshrl.u32 %v1050, 16
        %v1056 = vmul.u32 %v1052, %v1054
        %v1057 = vmul.u32 %v1052, %v1055
        %v1058 = vmul.u32 %v1053, %v1054
        %v1059 = vmul.u32 %v1053, %v1055
        %v1060 = vshll.u32 %v1057, 16
        %v1061 = vshrl.u32 %v1057, 16
        %v1062 = vshll.u32 %v1058, 16
        %v1063 = vshrl.u32 %v1058, 16
        %vm1064 = vc.u32 %v1056, %v1060
        %v1065 = vsel %vm1064, 1, 0
        %v1066 = vadd.s32 %v1056, %v1060
        %v1067 = vadd.s32 %v1059, %v1065
        %vm1068 = vc.u32 %v1066, %v1062
        %v1069 = vsel %vm1068, 1, 0
        %v1070 = vadd.s32 %v1066, %v1062
        %v1071 = vadd.s32 %v1067, %v1069
        %v1072 = vadd.s32 %v1071, %v1061
        %v1073 = vadd.s32 %v1072, %v1063
        %v1074 = vand.u32 %v1051, 65535
        %v1075 = vshrl.u32 %v1051, 16
        %v1076 = vand.u32 %v1046, 65535
        %v1077 = vshrl.u32 %v1046, 16
        %v1078 = vmul.u32 %v1074, %v1076
        %v1079 = vmul.u32 %v1074, %v1077
        %v1080 = vmul.u32 %v1075, %v1076
        %v1081 = vmul.u32 %v1075, %v1077
        %v1082 = vshll.u32 %v1079, 16
        %v1083 = vshrl.u32 %v1079, 16
        %v1084 = vshll.u32 %v1080, 16
        %v1085 = vshrl.u32 %v1080, 16
        %vm1086 = vc.u32 %v1078, %v1082
        %v1087 = vsel %vm1086, 1, 0
        %v1088 = vadd.s32 %v1078, %v1082
        %v1089 = vadd.s32 %v1081, %v1087
        %vm1090 = vc.u32 %v1088, %v1084
        %v1091 = vsel %vm1090, 1, 0
        %v1092 = vadd.s32 %v1088, %v1084
        %v1093 = vadd.s32 %v1089, %v1091
        %v1094 = vadd.s32 %v1093, %v1083
        %v1095 = vadd.s32 %v1094, %v1085
        %v1096 = vmul.u32 %v1051, %v1042
        %v1097 = vadd.s32 %v1073, %v1092
        %vm1098 = vc.u32 %v1073, %v1092
        %v1099 = vadd.s32 %v1095, 1
        %v1100 = vsel %vm1098, %v1099, %v1095
        %v1101 = vadd.s32 %v1096, %v1100
        %v1102 = vadd.s32 %v1101, 536870912
        %v1103 = vshrl.u32 %v1102, 30
        %v1104 = vshll.u32 %v1103, 30
        %v1105 = vsub.s32 %v1101, %v1104
        %vm1106 = vcmp.lt.s32.totalorder %v1105, 0
        %v1107 = vsub.s32 0, %v1105
        %v1108 = vsel %vm1106, %v1107, %v1105
        %v1109 = vclz %v1108
        %v1110 = vsub.s32 %v1109, 2
        %vm1111 = vcmp.gt.s32.totalorder 0, %v1110
        %v1112 = vsel %vm1111, 0, %v1110
        %v1113 = vsub.s32 32, %v1112
        %v1114 = vshll.u32 %v1105, %v1112
        %v1115 = vshrl.u32 %v1097, %v1113
        %v1116 = vor.u32 %v1114, %v1115
        %v1117 = vsub.s32 4294967266, %v1112
        %v1118 = vadd.s32 %v1117, 127
        %v1119 = vshll.u32 %v1118, 23
        %v1120 = vor.u32 4788187, %v1119
        %v1121 = vand.u32 2147483647, %v1120
        %v1123 = vcvt.s32.f32 %v1116
        %v1124 = vmul.f32 %v1123, %v1121
        %v1125 = vxor.u32 %v1124, 2147483648
        %v1126 = vsel %vm1005, %v1125, %v1124
        %v1127 = vsub.s32 4, %v1103
        %v1128 = vsel %vm1005, %v1127, %v1103
        %v1129 = vsel %vm1004, %v1001, %v1126
        %v1130 = vsel %vm1004, 0, %v1128
        %v1131 = vmul.f32 %v1129, %v1129
        %v1132 = vmul.f32 %v1131, -0.001358992
        %v1133 = vadd.f32 %v1132, 0.041655596
        %v1134 = vmul.f32 %v1131, %v1133
        %v1135 = vadd.f32 %v1134, -0.4999988
        %v1136 = vmul.f32 %v1131, %v1135
        %v1137 = vadd.f32 1.0, %v1136
        %v1138 = vmul.f32 %v1129, %v1129
        %v1139 = vmul.f32 %v1138, -0.00019511016
        %v1140 = vadd.f32 %v1139, 0.008332121
        %v1141 = vmul.f32 %v1138, %v1140
        %v1142 = vadd.f32 %v1141, -0.16666654
        %v1143 = vmul.f32 %v1138, %v1142
        %v1144 = vadd.f32 %v1143, 1.0
        %v1145 = vmul.f32 %v1144, %v1129
        %vm1146 = vweird.f32 %v1001
        %v1147 = vadd.s32 %v1130, 3
        %v1148 = vand.u32 %v1147, 3
        %vm1149 = vcmp.lt.s32.totalorder %v1148, 2
        %vm1150 = vcmp.eq.s32.totalorder %v1148, 0
        %v1151 = vxor.u32 %v1145, 2147483648
        %v1152 = vsel %vm1150, %v1137, %v1151
        %vm1153 = vcmp.eq.s32.totalorder %v1148, 2
        %v1154 = vxor.u32 %v1137, 2147483648
        %v1155 = vsel %vm1153, %v1154, %v1145
        %v1156 = vsel %vm1149, %v1152, %v1155
        %v1157 = vsel %vm1146, nan, %v1156
        %v1158 = vand.u32 2147483647, %v1002
        %vm1159 = vcmp.le.f32.partialorder %v1158, 0.7853982
        %vm1160 = vcmp.lt.s32.totalorder %v1002, 0
        %v1161 = vand.u32 %v1002, 2139095040
        %v1162 = vshrl.u32 %v1161, 23
        %v1163 = vsub.s32 %v1162, 127
        %v1164 = vand.u32 2147483647, %v1002
        %v1165 = vand.u32 %v1164, 8388607
        %v1166 = vor.u32 %v1165, 8388608
        %v1167 = vsub.s32 0, %v1166
        %v1168 = vadd.s32 %v1163, 1
        %vm1169 = vcmp.gt.s32.totalorder %v1168, 0
        %v1170 = vsel %vm1169, %v1168, 0
        %v1171 = vshrl.u32 %v1170, 5
        %v1172 = vand.u32 %v1170, 31
        %v1173 = vsub.s32 32, %v1172
        %v1174 = vshrl.u32 683565275, %v1173
        %v1175 = vshll.u32 683565275, %v1172
        %v1176 = vshrl.u32 2475754826, %v1173
        %v1177 = vor.u32 %v1175, %v1176
        %v1178 = vshll.u32 2475754826, %v1172
        %v1179 = vshrl.u32 2131351028, %v1173
        %v1180 = vor.u32 %v1178, %v1179
        %v1181 = vshll.u32 2131351028, %v1172
        %v1182 = vshrl.u32 2102212464, %v1173
        %v1183 = vor.u32 %v1181, %v1182
        %v1184 = vshll.u32 2102212464, %v1172
        %v1185 = vshrl.u32 920167782, %v1173
        %v1186 = vor.u32 %v1184, %v1185
        %v1187 = vshll.u32 920167782, %v1172
        %v1188 = vshrl.u32 1326507024, %v1173
        %v1189 = vor.u32 %v1187, %v1188
        %vm1190 = vcmp.lt.s32.totalorder %v1171, 1
        %vm1191 = vcmp.lt.s32.totalorder %v1171, 2
        %vm1192 = vcmp.lt.s32.totalorder %v1171, 3
        %vm1193 = vcmp.lt.s32.totalorder %v1171, 4
        %v1194 = vsel %vm1190, %v1174, %v1177
        %v1195 = vsel %vm1193, %v1183, 2102212464
        %v1196 = vsel %vm1192, %v1180, %v1195
        %v1197 = vsel %vm1191, %v1194, %v1196
        %v1198 = vsel %vm1190, %v1177, %v1180
        %v1199 = vsel %vm1193, %v1186, 920167782
        %v1200 = vsel %vm1192, %v1183, %v1199
        %v1201 = vsel %vm1191, %v1198, %v1200
        %v1202 = vsel %vm1190, %v1180, %v1183
        %v1203 = vsel %vm1193, %v1189, 1326507024
        %v1204 = vsel %vm1192, %v1186, %v1203
        %v1205 = vsel %vm1191, %v1202, %v1204
        %v1206 = vshll.u32 %v1166, 8
        %v1207 = vand.u32 %v1206, 65535
        %v1208 = vshrl.u32 %v1206, 16
        %v1209 = vand.u32 %v1205, 65535
        %v1210 = vshrl.u32 %v1205, 16
        %v1211 = vmul.u32 %v1207, %v1209
        %v1212 = vmul.u32 %v1207, %v1210
        %v1213 = vmul.u32 %v1208, %v1209
        %v1214 = vmul.u32 %v1208, %v1210
        %v1215 = vshll.u32 %v1212, 16
        %v1216 = vshrl.u32 %v1212, 16
        %v1217 = vshll.u32 %v1213, 16
        %v1218 = vshrl.u32 %v1213, 16
        %vm1219 = vc.u32 %v1211, %v1215
        %v1220 = vsel %vm1219, 1, 0
        %v1221 = vadd.s32 %v1211, %v1215
        %v1222 = vadd.s32 %v1214, %v1220
        %vm1223 = vc.u32 %v1221, %v1217
        %v1224 = vsel %vm1223, 1, 0
        %v1225 = vadd.s32 %v1221, %v1217
        %v1226 = vadd.s32 %v1222, %v1224
        %v1227 = vadd.s32 %v1226, %v1216
        %v1228 = vadd.s32 %v1227, %v1218
        %v1229 = vand.u32 %v1206, 65535
        %v1230 = vshrl.u32 %v1206, 16
        %v1231 = vand.u32 %v1201, 65535
        %v1232 = vshrl.u32 %v1201, 16
        %v1233 = vmul.u32 %v1229, %v1231
        %v1234 = vmul.u32 %v1229, %v1232
        %v1235 = vmul.u32 %v1230, %v1231
        %v1236 = vmul.u32 %v1230, %v1232
        %v1237 = vshll.u32 %v1234, 16
        %v1238 = vshrl.u32 %v1234, 16
        %v1239 = vshll.u32 %v1235, 16
        %v1240 = vshrl.u32 %v1235, 16
        %vm1241 = vc.u32 %v1233, %v1237
        %v1242 = vsel %vm1241, 1, 0
        %v1243 = vadd.s32 %v1233, %v1237
        %v1244 = vadd.s32 %v1236, %v1242
        %vm1245 = vc.u32 %v1243, %v1239
        %v1246 = vsel %vm1245, 1, 0
        %v1247 = vadd.s32 %v1243, %v1239
        %v1248 = vadd.s32 %v1244, %v1246
        %v1249 = vadd.s32 %v1248, %v1238
        %v1250 = vadd.s32 %v1249, %v1240
        %v1251 = vmul.u32 %v1206, %v1197
        %v1252 = vadd.s32 %v1228, %v1247
        %vm1253 = vc.u32 %v1228, %v1247
        %v1254 = vadd.s32 %v1250, 1
        %v1255 = vsel %vm1253, %v1254, %v1250
        %v1256 = vadd.s32 %v1251, %v1255
        %v1257 = vadd.s32 %v1256, 536870912
        %v1258 = vshrl.u32 %v1257, 30
        %v1259 = vshll.u32 %v1258, 30
        %v1260 = vsub.s32 %v1256, %v1259
        %vm1261 = vcmp.lt.s32.totalorder %v1260, 0
        %v1262 = vsub.s32 0, %v1260
        %v1263 = vsel %vm1261, %v1262, %v1260
        %v1264 = vclz %v1263
        %v1265 = vsub.s32 %v1264, 2
        %vm1266 = vcmp.gt.s32.totalorder 0, %v1265
        %v1267 = vsel %vm1266, 0, %v1265
        %v1268 = vsub.s32 32, %v1267
        %v1269 = vshll.u32 %v1260, %v1267
        %v1270 = vshrl.u32 %v1252, %v1268
        %v1271 = vor.u32 %v1269, %v1270
        %v1272 = vsub.s32 4294967266, %v1267
        %v1273 = vadd.s32 %v1272, 127
        %v1274 = vshll.u32 %v1273, 23
        %v1275 = vor.u32 4788187, %v1274
        %v1276 = vand.u32 2147483647, %v1275
        %v1278 = vcvt.s32.f32 %v1271
        %v1279 = vmul.f32 %v1278, %v1276
        %v1280 = vxor.u32 %v1279, 2147483648
        %v1281 = vsel %vm1160, %v1280, %v1279
        %v1282 = vsub.s32 4, %v1258
        %v1283 = vsel %vm1160, %v1282, %v1258
        %v1284 = vsel %vm1159, %v1002, %v1281
        %v1285 = vsel %vm1159, 0, %v1283
        %v1286 = vmul.f32 %v1284, %v1284
        %v1287 = vmul.f32 %v1286, -0.001358992
        %v1288 = vadd.f32 %v1287, 0.041655596
        %v1289 = vmul.f32 %v1286, %v1288
        %v1290 = vadd.f32 %v1289, -0.4999988
        %v1291 = vmul.f32 %v1286, %v1290
        %v1292 = vadd.f32 1.0, %v1291
        %v1293 = vmul.f32 %v1284, %v1284
        %v1294 = vmul.f32 %v1293, -0.00019511016
        %v1295 = vadd.f32 %v1294, 0.008332121
        %v1296 = vmul.f32 %v1293, %v1295
        %v1297 = vadd.f32 %v1296, -0.16666654
        %v1298 = vmul.f32 %v1293, %v1297
        %v1299 = vadd.f32 %v1298, 1.0
        %v1300 = vmul.f32 %v1299, %v1284
        %vm1301 = vweird.f32 %v1002
        %v1302 = vadd.s32 %v1285, 3
        %v1303 = vand.u32 %v1302, 3
        %vm1304 = vcmp.lt.s32.totalorder %v1303, 2
        %vm1305 = vcmp.eq.s32.totalorder %v1303, 0
        %v1306 = vxor.u32 %v1300, 2147483648
        %v1307 = vsel %vm1305, %v1292, %v1306
        %vm1308 = vcmp.eq.s32.totalorder %v1303, 2
        %v1309 = vxor.u32 %v1292, 2147483648
        %v1310 = vsel %vm1308, %v1309, %v1300
        %v1311 = vsel %vm1304, %v1307, %v1310
        %v1312 = vsel %vm1301, nan, %v1311
        %v1313 = vand.u32 2147483647, %v1001
        %vm1314 = vcmp.le.f32.partialorder %v1313, 0.7853982
        %vm1315 = vcmp.lt.s32.totalorder %v1001, 0
        %v1316 = vand.u32 %v1001, 2139095040
        %v1317 = vshrl.u32 %v1316, 23
        %v1318 = vsub.s32 %v1317, 127
        %v1319 = vand.u32 2147483647, %v1001
        %v1320 = vand.u32 %v1319, 8388607
        %v1321 = vor.u32 %v1320, 8388608
        %v1322 = vsub.s32 0, %v1321
        %v1323 = vadd.s32 %v1318, 1
        %vm1324 = vcmp.gt.s32.totalorder %v1323, 0
        %v1325 = vsel %vm1324, %v1323, 0
        %v1326 = vshrl.u32 %v1325, 5
        %v1327 = vand.u32 %v1325, 31
        %v1328 = vsub.s32 32, %v1327
        %v1329 = vshrl.u32 683565275, %v1328
        %v1330 = vshll.u32 683565275, %v1327
        %v1331 = vshrl.u32 2475754826, %v1328
        %v1332 = vor.u32 %v1330, %v1331
        %v1333 = vshll.u32 2475754826, %v1327
        %v1334 = vshrl.u32 2131351028, %v1328
        %v1335 = vor.u32 %v1333, %v1334
        %v1336 = vshll.u32 2131351028, %v1327
        %v1337 = vshrl.u32 2102212464, %v1328
        %v1338 = vor.u32 %v1336, %v1337
        %v1339 = vshll.u32 2102212464, %v1327
        %v1340 = vshrl.u32 920167782, %v1328
        %v1341 = vor.u32 %v1339, %v1340
        %v1342 = vshll.u32 920167782, %v1327
        %v1343 = vshrl.u32 1326507024, %v1328
        %v1344 = vor.u32 %v1342, %v1343
        %vm1345 = vcmp.lt.s32.totalorder %v1326, 1
        %vm1346 = vcmp.lt.s32.totalorder %v1326, 2
        %vm1347 = vcmp.lt.s32.totalorder %v1326, 3
        %vm1348 = vcmp.lt.s32.totalorder %v1326, 4
        %v1349 = vsel %vm1345, %v1329, %v1332
        %v1350 = vsel %vm1348, %v1338, 2102212464
        %v1351 = vsel %vm1347, %v1335, %v1350
        %v1352 = vsel %vm1346, %v1349, %v1351
        %v1353 = vsel %vm1345, %v1332, %v1335
        %v1354 = vsel %vm1348, %v1341, 920167782
        %v1355 = vsel %vm1347, %v1338, %v1354
        %v1356 = vsel %vm1346, %v1353, %v1355
        %v1357 = vsel %vm1345, %v1335, %v1338
        %v1358 = vsel %vm1348, %v1344, 1326507024
        %v1359 = vsel %vm1347, %v1341, %v1358
        %v1360 = vsel %vm1346, %v1357, %v1359
        %v1361 = vshll.u32 %v1321, 8
        %v1362 = vand.u32 %v1361, 65535
        %v1363 = vshrl.u32 %v1361, 16
        %v1364 = vand.u32 %v1360, 65535
        %v1365 = vshrl.u32 %v1360, 16
        %v1366 = vmul.u32 %v1362, %v1364
        %v1367 = vmul.u32 %v1362, %v1365
        %v1368 = vmul.u32 %v1363, %v1364
        %v1369 = vmul.u32 %v1363, %v1365
        %v1370 = vshll.u32 %v1367, 16
        %v1371 = vshrl.u32 %v1367, 16
        %v1372 = vshll.u32 %v1368, 16
        %v1373 = vshrl.u32 %v1368, 16
        %vm1374 = vc.u32 %v1366, %v1370
        %v1375 = vsel %vm1374, 1, 0
        %v1376 = vadd.s32 %v1366, %v1370
        %v1377 = vadd.s32 %v1369, %v1375
        %vm1378 = vc.u32 %v1376, %v1372
        %v1379 = vsel %vm1378, 1, 0
        %v1380 = vadd.s32 %v1376, %v1372
        %v1381 = vadd.s32 %v1377, %v1379
        %v1382 = vadd.s32 %v1381, %v1371
        %v1383 = vadd.s32 %v1382, %v1373
        %v1384 = vand.u32 %v1361, 65535
        %v1385 = vshrl.u32 %v1361, 16
        %v1386 = vand.u32 %v1356, 65535
        %v1387 = vshrl.u32 %v1356, 16
        %v1388 = vmul.u32 %v1384, %v1386
        %v1389 = vmul.u32 %v1384, %v1387
        %v1390 = vmul.u32 %v1385, %v1386
        %v1391 = vmul.u32 %v1385, %v1387
        %v1392 = vshll.u32 %v1389, 16
        %v1393 = vshrl.u32 %v1389, 16
        %v1394 = vshll.u32 %v1390, 16
        %v1395 = vshrl.u32 %v1390, 16
        %vm1396 = vc.u32 %v1388, %v1392
        %v1397 = vsel %vm1396, 1, 0
        %v1398 = vadd.s32 %v1388, %v1392
        %v1399 = vadd.s32 %v1391, %v1397
        %vm1400 = vc.u32 %v1398, %v1394
        %v1401 = vsel %vm1400, 1, 0
        %v1402 = vadd.s32 %v1398, %v1394
        %v1403 = vadd.s32 %v1399, %v1401
        %v1404 = vadd.s32 %v1403, %v1393
        %v1405 = vadd.s32 %v1404, %v1395
        %v1406 = vmul.u32 %v1361, %v1352
        %v1407 = vadd.s32 %v1383, %v1402
        %vm1408 = vc.u32 %v1383, %v1402
        %v1409 = vadd.s32 %v1405, 1
        %v1410 = vsel %vm1408, %v1409, %v1405
        %v1411 = vadd.s32 %v1406, %v1410
        %v1412 = vadd.s32 %v1411, 536870912
        %v1413 = vshrl.u32 %v1412, 30
        %v1414 = vshll.u32 %v1413, 30
        %v1415 = vsub.s32 %v1411, %v1414
        %vm1416 = vcmp.lt.s32.totalorder %v1415, 0
        %v1417 = vsub.s32 0, %v1415
        %v1418 = vsel %vm1416, %v1417, %v1415
        %v1419 = vclz %v1418
        %v1420 = vsub.s32 %v1419, 2
        %vm1421 = vcmp.gt.s32.totalorder 0, %v1420
        %v1422 = vsel %vm1421, 0, %v1420
        %v1423 = vsub.s32 32, %v1422
        %v1424 = vshll.u32 %v1415, %v1422
        %v1425 = vshrl.u32 %v1407, %v1423
        %v1426 = vor.u32 %v1424, %v1425
        %v1427 = vsub.s32 4294967266, %v1422
        %v1428 = vadd.s32 %v1427, 127
        %v1429 = vshll.u32 %v1428, 23
        %v1430 = vor.u32 4788187, %v1429
        %v1431 = vand.u32 2147483647, %v1430
        %v1433 = vcvt.s32.f32 %v1426
        %v1434 = vmul.f32 %v1433, %v1431
        %v1435 = vxor.u32 %v1434, 2147483648
        %v1436 = vsel %vm1315, %v1435, %v1434
        %v1437 = vsub.s32 4, %v1413
        %v1438 = vsel %vm1315, %v1437, %v1413
        %v1439 = vsel %vm1314, %v1001, %v1436
        %v1440 = vsel %vm1314, 0, %v1438
        %v1441 = vmul.f32 %v1439, %v1439
        %v1442 = vmul.f32 %v1441, -0.001358992
        %v1443 = vadd.f32 %v1442, 0.041655596
        %v1444 = vmul.f32 %v1441, %v1443
        %v1445 = vadd.f32 %v1444, -0.4999988
        %v1446 = vmul.f32 %v1441, %v1445
        %v1447 = vadd.f32 1.0, %v1446
        %v1448 = vmul.f32 %v1439, %v1439
        %v1449 = vmul.f32 %v1448, -0.00019511016
        %v1450 = vadd.f32 %v1449, 0.008332121
        %v1451 = vmul.f32 %v1448, %v1450
        %v1452 = vadd.f32 %v1451, -0.16666654
        %v1453 = vmul.f32 %v1448, %v1452
        %v1454 = vadd.f32 %v1453, 1.0
        %v1455 = vmul.f32 %v1454, %v1439
        %vm1456 = vweird.f32 %v1001
        %v1457 = vand.u32 %v1440, 3
        %vm1458 = vcmp.lt.s32.totalorder %v1457, 2
        %vm1459 = vcmp.eq.s32.totalorder %v1457, 0
        %v1460 = vxor.u32 %v1455, 2147483648
        %v1461 = vsel %vm1459, %v1447, %v1460
        %vm1462 = vcmp.eq.s32.totalorder %v1457, 2
        %v1463 = vxor.u32 %v1447, 2147483648
        %v1464 = vsel %vm1462, %v1463, %v1455
        %v1465 = vsel %vm1458, %v1461, %v1464
        %v1466 = vsel %vm1456, nan, %v1465
        %v1467 = vand.u32 2147483647, %v1002
        %vm1468 = vcmp.le.f32.partialorder %v1467, 0.7853982
        %vm1469 = vcmp.lt.s32.totalorder %v1002, 0
        %v1470 = vand.u32 %v1002, 2139095040
        %v1471 = vshrl.u32 %v1470, 23
        %v1472 = vsub.s32 %v1471, 127
        %v1473 = vand.u32 2147483647, %v1002
        %v1474 = vand.u32 %v1473, 8388607
        %v1475 = vor.u32 %v1474, 8388608
        %v1476 = vsub.s32 0, %v1475
        %v1477 = vadd.s32 %v1472, 1
        %vm1478 = vcmp.gt.s32.totalorder %v1477, 0
        %v1479 = vsel %vm1478, %v1477, 0
        %v1480 = vshrl.u32 %v1479, 5
        %v1481 = vand.u32 %v1479, 31
        %v1482 = vsub.s32 32, %v1481
        %v1483 = vshrl.u32 683565275, %v1482
        %v1484 = vshll.u32 683565275, %v1481
        %v1485 = vshrl.u32 2475754826, %v1482
        %v1486 = vor.u32 %v1484, %v1485
        %v1487 = vshll.u32 2475754826, %v1481
        %v1488 = vshrl.u32 2131351028, %v1482
        %v1489 = vor.u32 %v1487, %v1488
        %v1490 = vshll.u32 2131351028, %v1481
        %v1491 = vshrl.u32 2102212464, %v1482
        %v1492 = vor.u32 %v1490, %v1491
        %v1493 = vshll.u32 2102212464, %v1481
        %v1494 = vshrl.u32 920167782, %v1482
        %v1495 = vor.u32 %v1493, %v1494
        %v1496 = vshll.u32 920167782, %v1481
        %v1497 = vshrl.u32 1326507024, %v1482
        %v1498 = vor.u32 %v1496, %v1497
        %vm1499 = vcmp.lt.s32.totalorder %v1480, 1
        %vm1500 = vcmp.lt.s32.totalorder %v1480, 2
        %vm1501 = vcmp.lt.s32.totalorder %v1480, 3
        %vm1502 = vcmp.lt.s32.totalorder %v1480, 4
        %v1503 = vsel %vm1499, %v1483, %v1486
        %v1504 = vsel %vm1502, %v1492, 2102212464
        %v1505 = vsel %vm1501, %v1489, %v1504
        %v1506 = vsel %vm1500, %v1503, %v1505
        %v1507 = vsel %vm1499, %v1486, %v1489
        %v1508 = vsel %vm1502, %v1495, 920167782
        %v1509 = vsel %vm1501, %v1492, %v1508
        %v1510 = vsel %vm1500, %v1507, %v1509
        %v1511 = vsel %vm1499, %v1489, %v1492
        %v1512 = vsel %vm1502, %v1498, 1326507024
        %v1513 = vsel %vm1501, %v1495, %v1512
        %v1514 = vsel %vm1500, %v1511, %v1513
        %v1515 = vshll.u32 %v1475, 8
        %v1516 = vand.u32 %v1515, 65535
        %v1517 = vshrl.u32 %v1515, 16
        %v1518 = vand.u32 %v1514, 65535
        %v1519 = vshrl.u32 %v1514, 16
        %v1520 = vmul.u32 %v1516, %v1518
        %v1521 = vmul.u32 %v1516, %v1519
        %v1522 = vmul.u32 %v1517, %v1518
        %v1523 = vmul.u32 %v1517, %v1519
        %v1524 = vshll.u32 %v1521, 16
        %v1525 = vshrl.u32 %v1521, 16
        %v1526 = vshll.u32 %v1522, 16
        %v1527 = vshrl.u32 %v1522, 16
        %vm1528 = vc.u32 %v1520, %v1524
        %v1529 = vsel %vm1528, 1, 0
        %v1530 = vadd.s32 %v1520, %v1524
        %v1531 = vadd.s32 %v1523, %v1529
        %vm1532 = vc.u32 %v1530, %v1526
        %v1533 = vsel %vm1532, 1, 0
        %v1534 = vadd.s32 %v1530, %v1526
        %v1535 = vadd.s32 %v1531, %v1533
        %v1536 = vadd.s32 %v1535, %v1525
        %v1537 = vadd.s32 %v1536, %v1527
        %v1538 = vand.u32 %v1515, 65535
        %v1539 = vshrl.u32 %v1515, 16
        %v1540 = vand.u32 %v1510, 65535
        %v1541 = vshrl.u32 %v1510, 16
        %v1542 = vmul.u32 %v1538, %v1540
        %v1543 = vmul.u32 %v1538, %v1541
        %v1544 = vmul.u32 %v1539, %v1540
        %v1545 = vmul.u32 %v1539, %v1541
        %v1546 = vshll.u32 %v1543, 16
        %v1547 = vshrl.u32 %v1543, 16
        %v1548 = vshll.u32 %v1544, 16
        %v1549 = vshrl.u32 %v1544, 16
        %vm1550 = vc.u32 %v1542, %v1546
        %v1551 = vsel %vm1550, 1, 0
        %v1552 = vadd.s32 %v1542, %v1546
        %v1553 = vadd.s32 %v1545, %v1551
        %vm1554 = vc.u32 %v1552, %v1548
        %v1555 = vsel %vm1554, 1, 0
        %v1556 = vadd.s32 %v1552, %v1548
        %v1557 = vadd.s32 %v1553, %v1555
        %v1558 = vadd.s32 %v1557, %v1547
        %v1559 = vadd.s32 %v1558, %v1549
        %v1560 = vmul.u32 %v1515, %v1506
        %v1561 = vadd.s32 %v1537, %v1556
        %vm1562 = vc.u32 %v1537, %v1556
        %v1563 = vadd.s32 %v1559, 1
        %v1564 = vsel %vm1562, %v1563, %v1559
        %v1565 = vadd.s32 %v1560, %v1564
        %v1566 = vadd.s32 %v1565, 536870912
        %v1567 = vshrl.u32 %v1566, 30
        %v1568 = vshll.u32 %v1567, 30
        %v1569 = vsub.s32 %v1565, %v1568
        %vm1570 = vcmp.lt.s32.totalorder %v1569, 0
        %v1571 = vsub.s32 0, %v1569
        %v1572 = vsel %vm1570, %v1571, %v1569
        %v1573 = vclz %v1572
        %v1574 = vsub.s32 %v1573, 2
        %vm1575 = vcmp.gt.s32.totalorder 0, %v1574
        %v1576 = vsel %vm1575, 0, %v1574
        %v1577 = vsub.s32 32, %v1576
        %v1578 = vshll.u32 %v1569, %v1576
        %v1579 = vshrl.u32 %v1561, %v1577
        %v1580 = vor.u32 %v1578, %v1579
        %v1581 = vsub.s32 4294967266, %v1576
        %v1582 = vadd.s32 %v1581, 127
        %v1583 = vshll.u32 %v1582, 23
        %v1584 = vor.u32 4788187, %v1583
        %v1585 = vand.u32 2147483647, %v1584
        %v1587 = vcvt.s32.f32 %v1580
        %v1588 = vmul.f32 %v1587, %v1585
        %v1589 = vxor.u32 %v1588, 2147483648
        %v1590 = vsel %vm1469, %v1589, %v1588
        %v1591 = vsub.s32 4, %v1567
        %v1592 = vsel %vm1469, %v1591, %v1567
        %v1593 = vsel %vm1468, %v1002, %v1590
        %v1594 = vsel %vm1468, 0, %v1592
        %v1595 = vmul.f32 %v1593, %v1593
        %v1596 = vmul.f32 %v1595, -0.001358992
        %v1597 = vadd.f32 %v1596, 0.041655596
        %v1598 = vmul.f32 %v1595, %v1597
        %v1599 = vadd.f32 %v1598, -0.4999988
        %v1600 = vmul.f32 %v1595, %v1599
        %v1601 = vadd.f32 1.0, %v1600
        %v1602 = vmul.f32 %v1593, %v1593
        %v1603 = vmul.f32 %v1602, -0.00019511016
        %v1604 = vadd.f32 %v1603, 0.008332121
        %v1605 = vmul.f32 %v1602, %v1604
        %v1606 = vadd.f32 %v1605, -0.16666654
        %v1607 = vmul.f32 %v1602, %v1606
        %v1608 = vadd.f32 %v1607, 1.0
        %v1609 = vmul.f32 %v1608, %v1593
        %vm1610 = vweird.f32 %v1002
        %v1611 = vand.u32 %v1594, 3
        %vm1612 = vcmp.lt.s32.totalorder %v1611, 2
        %vm1613 = vcmp.eq.s32.totalorder %v1611, 0
        %v1614 = vxor.u32 %v1609, 2147483648
        %v1615 = vsel %vm1613, %v1601, %v1614
        %vm1616 = vcmp.eq.s32.totalorder %v1611, 2
        %v1617 = vxor.u32 %v1601, 2147483648
        %v1618 = vsel %vm1616, %v1617, %v1609
        %v1619 = vsel %vm1612, %v1615, %v1618
        %v1620 = vsel %vm1610, nan, %v1619
        %v1621 = vmul.f32 %v1466, 2.0
        %v1622 = vmul.f32 %v1620, 2.0
        %v1623 = vmul.f32 %v803, %v1157
        %v1624 = vmul.f32 %v804, %v1312
        %v1625 = vmul.f32 %v1621, %v1157
        %v1626 = vmul.f32 %v1622, %v1312
        %v1629 = vrot.slane %v1625, 7
        %v1630 = vrot.slane %v1626, 7
        %v1633 = vmul.f32 %v803, %v1629
        %v1634 = vmul.f32 %v804, %v1630
        %v1637 = vrot.slane %v1633, 1
        %v1638 = vrot.slane %v1634, 1
        %v1641 = vadd.f32 %v1623, %v1637
        %v1642 = vadd.f32 %v1624, %v1638
        %v1643 = vmul.f32 %v1621, %v1625
        %v1644 = vmul.f32 %v1622, %v1626
        %v1645 = vsub.f32 %v1643, %v1157
        %v1646 = vsub.f32 %v1644, %v1312
        %v1649 = vrot.slane %v1645, 6
        %v1650 = vrot.slane %v1646, 6
        %v1653 = vmul.f32 %v803, %v1649
        %v1654 = vmul.f32 %v804, %v1650
        %v1657 = vrot.slane %v1653, 2
        %v1658 = vrot.slane %v1654, 2
        %v1661 = vadd.f32 %v1641, %v1657
        %v1662 = vadd.f32 %v1642, %v1658
        %v1663 = vmul.f32 %v1621, %v1645
        %v1664 = vmul.f32 %v1622, %v1646
        %v1665 = vsub.f32 %v1663, %v1625
        %v1666 = vsub.f32 %v1664, %v1626
        %v1669 = vrot.slane %v1665, 5
        %v1670 = vrot.slane %v1666, 5
        %v1673 = vmul.f32 %v803, %v1669
        %v1674 = vmul.f32 %v804, %v1670
        %v1677 = vrot.slane %v1673, 3
        %v1678 = vrot.slane %v1674, 3
        %v1681 = vadd.f32 %v1661, %v1677
        %v1682 = vadd.f32 %v1662, %v1678
        %v1683 = vmul.f32 %v1621, %v1665
        %v1684 = vmul.f32 %v1622, %v1666
        %v1685 = vsub.f32 %v1683, %v1645
        %v1686 = vsub.f32 %v1684, %v1646
        %v1689 = vrot.slane %v1685, 4
        %v1690 = vrot.slane %v1686, 4
        %v1693 = vmul.f32 %v803, %v1689
        %v1694 = vmul.f32 %v804, %v1690
        %v1697 = vrot.slane %v1693, 4
        %v1698 = vrot.slane %v1694, 4
        %v1701 = vadd.f32 %v1681, %v1697
        %v1702 = vadd.f32 %v1682, %v1698
        %v1703 = vmul.f32 %v1621, %v1685
        %v1704 = vmul.f32 %v1622, %v1686
        %v1705 = vsub.f32 %v1703, %v1665
        %v1706 = vsub.f32 %v1704, %v1666
        %v1709 = vrot.slane %v1705, 3
        %v1710 = vrot.slane %v1706, 3
        %v1713 = vmul.f32 %v803, %v1709
        %v1714 = vmul.f32 %v804, %v1710
        %v1717 = vrot.slane %v1713, 5
        %v1718 = vrot.slane %v1714, 5
        %v1721 = vadd.f32 %v1701, %v1717
        %v1722 = vadd.f32 %v1702, %v1718
        %v1723 = vmul.f32 %v1621, %v1705
        %v1724 = vmul.f32 %v1622, %v1706
        %v1725 = vsub.f32 %v1723, %v1685
        %v1726 = vsub.f32 %v1724, %v1686
        %v1729 = vrot.slane %v1725, 2
        %v1730 = vrot.slane %v1726, 2
        %v1733 = vmul.f32 %v803, %v1729
        %v1734 = vmul.f32 %v804, %v1730
        %v1737 = vrot.slane %v1733, 6
        %v1738 = vrot.slane %v1734, 6
        %v1741 = vadd.f32 %v1721, %v1737
        %v1742 = vadd.f32 %v1722, %v1738
        %v1743 = vmul.f32 %v1621, %v1725
        %v1744 = vmul.f32 %v1622, %v1726
        %v1745 = vsub.f32 %v1743, %v1705
        %v1746 = vsub.f32 %v1744, %v1706
        %v1749 = vrot.slane %v1745, 1
        %v1750 = vrot.slane %v1746, 1
        %v1753 = vmul.f32 %v803, %v1749
        %v1754 = vmul.f32 %v804, %v1750
        %v1757 = vrot.slane %v1753, 7
        %v1758 = vrot.slane %v1754, 7
        %v1761 = vadd.f32 %v1741, %v1757
        %v1762 = vadd.f32 %v1742, %v1758
        %v1763 = vmul.f32 %v1621, %v1745
        %v1764 = vmul.f32 %v1622, %v1746
        %v1765 = vsub.f32 %v1763, %v1725
        %v1766 = vsub.f32 %v1764, %v1726
        %v1767 = vmul.f32 %v805, %v1765
        %v1768 = vmul.f32 %v806, %v1766
        %v1769 = vadd.f32 %v1761, %v1767
        %v1770 = vadd.f32 %v1762, %v1768
        %v1771 = vmul.f32 %v1621, %v1765
        %v1772 = vmul.f32 %v1622, %v1766
        %v1773 = vsub.f32 %v1771, %v1745
        %v1774 = vsub.f32 %v1772, %v1746
        %v1777 = vrot.slane %v1773, 7
        %v1778 = vrot.slane %v1774, 7
        %v1781 = vmul.f32 %v805, %v1777
        %v1782 = vmul.f32 %v806, %v1778
        %v1785 = vrot.slane %v1781, 1
        %v1786 = vrot.slane %v1782, 1
        %v1789 = vadd.f32 %v1769, %v1785
        %v1790 = vadd.f32 %v1770, %v1786
        %v1791 = vmul.f32 %v1621, %v1773
        %v1792 = vmul.f32 %v1622, %v1774
        %v1793 = vsub.f32 %v1791, %v1765
        %v1794 = vsub.f32 %v1792, %v1766
        %v1797 = vrot.slane %v1793, 6
        %v1798 = vrot.slane %v1794, 6
        %v1801 = vmul.f32 %v805, %v1797
        %v1802 = vmul.f32 %v806, %v1798
        %v1805 = vrot.slane %v1801, 2
        %v1806 = vrot.slane %v1802, 2
        %v1809 = vadd.f32 %v1789, %v1805
        %v1810 = vadd.f32 %v1790, %v1806
        %v1811 = vmul.f32 %v1621, %v1793
        %v1812 = vmul.f32 %v1622, %v1794
        %v1813 = vsub.f32 %v1811, %v1773
        %v1814 = vsub.f32 %v1812, %v1774
        %v1817 = vrot.slane %v1813, 5
        %v1818 = vrot.slane %v1814, 5
        %v1821 = vmul.f32 %v805, %v1817
        %v1822 = vmul.f32 %v806, %v1818
        %v1825 = vrot.slane %v1821, 3
        %v1826 = vrot.slane %v1822, 3
        %v1829 = vadd.f32 %v1809, %v1825
        %v1830 = vadd.f32 %v1810, %v1826
        %v1831 = vmul.f32 %v1621, %v1813
        %v1832 = vmul.f32 %v1622, %v1814
        %v1833 = vsub.f32 %v1831, %v1793
        %v1834 = vsub.f32 %v1832, %v1794
        %v1837 = vrot.slane %v1833, 4
        %v1838 = vrot.slane %v1834, 4
        %v1841 = vmul.f32 %v805, %v1837
        %v1842 = vmul.f32 %v806, %v1838
        %v1845 = vrot.slane %v1841, 4
        %v1846 = vrot.slane %v1842, 4
        %v1849 = vadd.f32 %v1829, %v1845
        %v1850 = vadd.f32 %v1830, %v1846
        %v1851 = vmul.f32 %v1621, %v1833
        %v1852 = vmul.f32 %v1622, %v1834
        %v1853 = vsub.f32 %v1851, %v1813
        %v1854 = vsub.f32 %v1852, %v1814
        %v1857 = vrot.slane %v1853, 3
        %v1858 = vrot.slane %v1854, 3
        %v1861 = vmul.f32 %v805, %v1857
        %v1862 = vmul.f32 %v806, %v1858
        %v1865 = vrot.slane %v1861, 5
        %v1866 = vrot.slane %v1862, 5
        %v1869 = vadd.f32 %v1849, %v1865
        %v1870 = vadd.f32 %v1850, %v1866
        %v1871 = vmul.f32 %v1621, %v1853
        %v1872 = vmul.f32 %v1622, %v1854
        %v1873 = vsub.f32 %v1871, %v1833
        %v1874 = vsub.f32 %v1872, %v1834
        %v1877 = vrot.slane %v1873, 2
        %v1878 = vrot.slane %v1874, 2
        %v1881 = vmul.f32 %v805, %v1877
        %v1882 = vmul.f32 %v806, %v1878
        %v1885 = vrot.slane %v1881, 6
        %v1886 = vrot.slane %v1882, 6
        %v1889 = vadd.f32 %v1869, %v1885
        %v1890 = vadd.f32 %v1870, %v1886
        %v1891 = vmul.f32 %v1621, %v1873
        %v1892 = vmul.f32 %v1622, %v1874
        %v1893 = vsub.f32 %v1891, %v1853
        %v1894 = vsub.f32 %v1892, %v1854
        %v1897 = vrot.slane %v1893, 1
        %v1898 = vrot.slane %v1894, 1
        %v1901 = vmul.f32 %v805, %v1897
        %v1902 = vmul.f32 %v806, %v1898
        %v1905 = vrot.slane %v1901, 7
        %v1906 = vrot.slane %v1902, 7
        %v1909 = vadd.f32 %v1889, %v1905
        %v1910 = vadd.f32 %v1890, %v1906
        %v1911 = vmul.f32 %v1621, %v1893
        %v1912 = vmul.f32 %v1622, %v1894
        %v1913 = vsub.f32 %v1911, %v1873
        %v1914 = vsub.f32 %v1912, %v1874
        %v1915 = vmul.f32 %v807, %v1913
        %v1916 = vmul.f32 %v808, %v1914
        %v1917 = vadd.f32 %v1909, %v1915
        %v1918 = vadd.f32 %v1910, %v1916
        %v1919 = vmul.f32 %v1621, %v1913
        %v1920 = vmul.f32 %v1622, %v1914
        %v1921 = vsub.f32 %v1919, %v1893
        %v1922 = vsub.f32 %v1920, %v1894
        %v1925 = vrot.slane %v1921, 7
        %v1926 = vrot.slane %v1922, 7
        %v1929 = vmul.f32 %v807, %v1925
        %v1930 = vmul.f32 %v808, %v1926
        %v1933 = vrot.slane %v1929, 1
        %v1934 = vrot.slane %v1930, 1
        %v1937 = vadd.f32 %v1917, %v1933
        %v1938 = vadd.f32 %v1918, %v1934
        %v1939 = vmul.f32 %v1621, %v1921
        %v1940 = vmul.f32 %v1622, %v1922
        %v1941 = vsub.f32 %v1939, %v1913
        %v1942 = vsub.f32 %v1940, %v1914
        %v1945 = vrot.slane %v1941, 6
        %v1946 = vrot.slane %v1942, 6
        %v1949 = vmul.f32 %v807, %v1945
        %v1950 = vmul.f32 %v808, %v1946
        %v1953 = vrot.slane %v1949, 2
        %v1954 = vrot.slane %v1950, 2
        %v1957 = vadd.f32 %v1937, %v1953
        %v1958 = vadd.f32 %v1938, %v1954
        %v1959 = vmul.f32 %v1621, %v1941
        %v1960 = vmul.f32 %v1622, %v1942
        %v1961 = vsub.f32 %v1959, %v1921
        %v1962 = vsub.f32 %v1960, %v1922
        %v1965 = vrot.slane %v1961, 5
        %v1966 = vrot.slane %v1962, 5
        %v1969 = vmul.f32 %v807, %v1965
        %v1970 = vmul.f32 %v808, %v1966
        %v1973 = vrot.slane %v1969, 3
        %v1974 = vrot.slane %v1970, 3
        %v1977 = vadd.f32 %v1957, %v1973
        %v1978 = vadd.f32 %v1958, %v1974
        %v1979 = vmul.f32 %v1621, %v1961
        %v1980 = vmul.f32 %v1622, %v1962
        %v1981 = vsub.f32 %v1979, %v1941
        %v1982 = vsub.f32 %v1980, %v1942
        %v1985 = vrot.slane %v1981, 4
        %v1986 = vrot.slane %v1982, 4
        %v1989 = vmul.f32 %v807, %v1985
        %v1990 = vmul.f32 %v808, %v1986
        %v1993 = vrot.slane %v1989, 4
        %v1994 = vrot.slane %v1990, 4
        %v1997 = vadd.f32 %v1977, %v1993
        %v1998 = vadd.f32 %v1978, %v1994
        %v1999 = vmul.f32 %v1621, %v1981
        %v2000 = vmul.f32 %v1622, %v1982
        %v2001 = vsub.f32 %v1999, %v1961
        %v2002 = vsub.f32 %v2000, %v1962
        %v2005 = vrot.slane %v2001, 3
        %v2006 = vrot.slane %v2002, 3
        %v2009 = vmul.f32 %v807, %v2005
        %v2010 = vmul.f32 %v808, %v2006
        %v2013 = vrot.slane %v2009, 5
        %v2014 = vrot.slane %v2010, 5
        %v2017 = vadd.f32 %v1997, %v2013
        %v2018 = vadd.f32 %v1998, %v2014
        %v2019 = vmul.f32 %v1621, %v2001
        %v2020 = vmul.f32 %v1622, %v2002
        %v2021 = vsub.f32 %v2019, %v1981
        %v2022 = vsub.f32 %v2020, %v1982
        %v2025 = vrot.slane %v2021, 2
        %v2026 = vrot.slane %v2022, 2
        %v2029 = vmul.f32 %v807, %v2025
        %v2030 = vmul.f32 %v808, %v2026
        %v2033 = vrot.slane %v2029, 6
        %v2034 = vrot.slane %v2030, 6
        %v2037 = vadd.f32 %v2017, %v2033
        %v2038 = vadd.f32 %v2018, %v2034
        %v2039 = vmul.f32 %v1621, %v2021
        %v2040 = vmul.f32 %v1622, %v2022
        %v2041 = vsub.f32 %v2039, %v2001
        %v2042 = vsub.f32 %v2040, %v2002
        %v2045 = vrot.slane %v2041, 1
        %v2046 = vrot.slane %v2042, 1
        %v2049 = vmul.f32 %v807, %v2045
        %v2050 = vmul.f32 %v808, %v2046
        %v2053 = vrot.slane %v2049, 7
        %v2054 = vrot.slane %v2050, 7
        %v2057 = vadd.f32 %v2037, %v2053
        %v2058 = vadd.f32 %v2038, %v2054
        %v2059 = vmul.f32 %v1621, %v2041
        %v2060 = vmul.f32 %v1622, %v2042
        %v2061 = vsub.f32 %v2059, %v2021
        %v2062 = vsub.f32 %v2060, %v2022
        %v2063 = vmul.f32 %v809, %v2061
        %v2064 = vmul.f32 %v810, %v2062
        %v2065 = vadd.f32 %v2057, %v2063
        %v2066 = vadd.f32 %v2058, %v2064
        %v2067 = vmul.f32 %v1621, %v2061
        %v2068 = vmul.f32 %v1622, %v2062
        %v2069 = vsub.f32 %v2067, %v2041
        %v2070 = vsub.f32 %v2068, %v2042
        %v2073 = vrot.slane %v2069, 7
        %v2074 = vrot.slane %v2070, 7
        %v2077 = vmul.f32 %v809, %v2073
        %v2078 = vmul.f32 %v810, %v2074
        %v2081 = vrot.slane %v2077, 1
        %v2082 = vrot.slane %v2078, 1
        %v2085 = vadd.f32 %v2065, %v2081
        %v2086 = vadd.f32 %v2066, %v2082
        %v2087 = vmul.f32 %v1621, %v2069
        %v2088 = vmul.f32 %v1622, %v2070
        %v2089 = vsub.f32 %v2087, %v2061
        %v2090 = vsub.f32 %v2088, %v2062
        %v2093 = vrot.slane %v2089, 6
        %v2094 = vrot.slane %v2090, 6
        %v2097 = vmul.f32 %v809, %v2093
        %v2098 = vmul.f32 %v810, %v2094
        %v2101 = vrot.slane %v2097, 2
        %v2102 = vrot.slane %v2098, 2
        %v2105 = vadd.f32 %v2085, %v2101
        %v2106 = vadd.f32 %v2086, %v2102
        %v2107 = vmul.f32 %v1621, %v2089
        %v2108 = vmul.f32 %v1622, %v2090
        %v2109 = vsub.f32 %v2107, %v2069
        %v2110 = vsub.f32 %v2108, %v2070
        %v2113 = vrot.slane %v2109, 5
        %v2114 = vrot.slane %v2110, 5
        %v2117 = vmul.f32 %v809, %v2113
        %v2118 = vmul.f32 %v810, %v2114
        %v2121 = vrot.slane %v2117, 3
        %v2122 = vrot.slane %v2118, 3
        %v2125 = vadd.f32 %v2105, %v2121
        %v2126 = vadd.f32 %v2106, %v2122
        %v2127 = vmul.f32 %v1621, %v2109
        %v2128 = vmul.f32 %v1622, %v2110
        %v2129 = vsub.f32 %v2127, %v2089
        %v2130 = vsub.f32 %v2128, %v2090
        %v2133 = vrot.slane %v2129, 4
        %v2134 = vrot.slane %v2130, 4
        %v2137 = vmul.f32 %v809, %v2133
        %v2138 = vmul.f32 %v810, %v2134
        %v2141 = vrot.slane %v2137, 4
        %v2142 = vrot.slane %v2138, 4
        %v2145 = vadd.f32 %v2125, %v2141
        %v2146 = vadd.f32 %v2126, %v2142
        %v2147 = vmul.f32 %v1621, %v2129
        %v2148 = vmul.f32 %v1622, %v2130
        %v2149 = vsub.f32 %v2147, %v2109
        %v2150 = vsub.f32 %v2148, %v2110
        %v2153 = vrot.slane %v2149, 3
        %v2154 = vrot.slane %v2150, 3
        %v2157 = vmul.f32 %v809, %v2153
        %v2158 = vmul.f32 %v810, %v2154
        %v2161 = vrot.slane %v2157, 5
        %v2162 = vrot.slane %v2158, 5
        %v2165 = vadd.f32 %v2145, %v2161
        %v2166 = vadd.f32 %v2146, %v2162
        %v2167 = vmul.f32 %v1621, %v2149
        %v2168 = vmul.f32 %v1622, %v2150
        %v2169 = vsub.f32 %v2167, %v2129
        %v2170 = vsub.f32 %v2168, %v2130
        %v2173 = vrot.slane %v2169, 2
        %v2174 = vrot.slane %v2170, 2
        %v2177 = vmul.f32 %v809, %v2173
        %v2178 = vmul.f32 %v810, %v2174
        %v2181 = vrot.slane %v2177, 6
        %v2182 = vrot.slane %v2178, 6
        %v2185 = vadd.f32 %v2165, %v2181
        %v2186 = vadd.f32 %v2166, %v2182
        %v2187 = vmul.f32 %v1621, %v2169
        %v2188 = vmul.f32 %v1622, %v2170
        %v2189 = vsub.f32 %v2187, %v2149
        %v2190 = vsub.f32 %v2188, %v2150
        %v2193 = vrot.slane %v2189, 1
        %v2194 = vrot.slane %v2190, 1
        %v2197 = vmul.f32 %v809, %v2193
        %v2198 = vmul.f32 %v810, %v2194
        %v2201 = vrot.slane %v2197, 7
        %v2202 = vrot.slane %v2198, 7
        %v2205 = vadd.f32 %v2185, %v2201
        %v2206 = vadd.f32 %v2186, %v2202
        %v2207 = vmul.f32 %v2205, %v817
        %v2208 = vmul.f32 %v2206, %v818
        %v2211 = vrot.slane %v2208, 7
        %v2212 = vsel %vm975, %v2207, %v2211
        %v2214 = vlaneseq
        %vm2215 = vcmp.ge.s32.totalorder %v2214, 0
        %vm2216 = vcmp.lt.s32.totalorder %v2214, 256
        %vm2217 = vmand %vm2215, %vm2216
        %2218 = vst.msk [vmem:[%s287] sm:$0x3] %vm2217, %v2212
        %s2219 = sand.u32 %s169, 1
        %s2220 = scalar_lea.sflag [#allocation5], %s2219
        %s2221 = sand.u32 %s169, 1
        %s2222 = smul.addr %s2221, 2
        %s2223 = scalar_lea.vmem [#allocation6], %s2222
        // Predicated region
        $region49: #{tpu_custom_call.1} parent=39 // pred_check
          %p2224 = pneg %p179
        $region50: #{tpu_custom_call.1} parent=39 // pred_check_branch
          %2226 = sbr.rel (%p2224) target = $region52
        $region51: #{tpu_custom_call.1} parent=39 // pred_region
          %s2227 = smul.u32 %s24, 2
          %s2228 = sadd.s32 %s2227, %s25
          %2230 = vsyncadd %s2220, 0
          %s2231 = smul.addr %s2228, 2
          %s2232 = scalar_lea.hbm %s5, %s2231
          %s2234 = sshll.u32 %s2223, 4
          %s2235 = int_to_ptr.vmem [resolvable:$true] %s2234
          %s2236 = sshll.u32 %s2232, 4
          %s2237 = int_to_ptr.hbm [resolvable:$true] %s2236
          %2239 = dma.vmem_to_hbm [thread:$0]  %s2235, 32, %s2237, %s2220
        $region52: #{tpu_custom_call.1} parent=39 // pred_fallthru
          _
      $region40: #{tpu_custom_call.1} parent=5 // pred_fallthru
        _
      %p2240 = scmp.le.s32.totalorder 2, %s15
      // Predicated region
      $region53: #{tpu_custom_call.1} parent=5 // pred_check
        %p2241 = pneg %p2240
      $region54: #{tpu_custom_call.1} parent=5 // pred_check_branch
        %2243 = sbr.rel (%p2241) target = $region56
      $region55: #{tpu_custom_call.1} parent=5 // pred_region
        %s2244 = ssub.s32 %s15, 2
        // Predicated region
        $region57: #{tpu_custom_call.1} parent=55 // pred_check
          %p2245 = pneg %p185
        $region58: #{tpu_custom_call.1} parent=55 // pred_check_branch
          %2247 = sbr.rel (%p2245) target = $region60
        $region59: #{tpu_custom_call.1} parent=55 // pred_region
          %s2248 = sand.u32 %s170, 1
          %s2249 = scalar_lea.sflag [#allocation5], %s2248
          %s2250 = sand.u32 %s170, 1
          %s2251 = smul.addr %s2250, 2
          %s2252 = scalar_lea.vmem [#allocation6], %s2251
          %2254 = dma.done %s2249, 32
        $region60: #{tpu_custom_call.1} parent=55 // pred_fallthru
          _
      $region56: #{tpu_custom_call.1} parent=5 // pred_fallthru
        _
    $region6: #{tpu_custom_call.1} parent=1 // loop_footer
      %s19 = sadd.s32 1, %s15
    $region7: #{tpu_custom_call.1} parent=1 // loop_footer_branch
      %14 = sbr.rel target = $region3
    $region8: #{tpu_custom_call.1} parent=1 // loop_exit
      _
    %2255 = vsyncpa [#allocation4], 1
    %s2256 = scalar_lea.sflag [#allocation4], 1
    %2257 = vsyncpa %s2256, 1
    %2258 = vsyncpa [#allocation5], 1
    %s2259 = scalar_lea.sflag [#allocation5], 1
    %2260 = vsyncpa %s2259, 1

</llo_original>
